<compile_context>
chip_gen: v5e
topology: v5e:2x2
jax: 0.10.0
libtpu: 0.0.40
codegen_flags: <defaults>
</compile_context>

<pallas_src>
import functools

import numpy as np

import jax
import jax.numpy as jnp
from jax.experimental import pallas as pl
from jax.experimental.pallas import tpu as pltpu


_SQRT_HALF = 0.7071067811865476


def _gelu_exact(x):
    # GELU(x) = 0.5*x*(1+erf(x/sqrt(2))).  erf is evaluated with the
    # Abramowitz & Stegun 7.1.26 rational approximation (|err| <= 1.5e-7):
    # only VPU/EUP ops, so it does not rely on a lax.erf Mosaic lowering and
    # still matches torch's exact (erf-based) GELU to float32 noise level.
    z = x * _SQRT_HALF
    az = jnp.abs(z)
    t = 1.0 / (1.0 + 0.3275911 * az)
    poly = t * (0.254829592 + t * (-0.284496736 + t * (1.421413741
               + t * (-1.453152027 + t * 1.061405429))))
    e = 1.0 - poly * jnp.exp(-az * az)
    erf = jnp.where(z < 0, -e, e)
    return 0.5 * x * (1.0 + erf)


# -----------------------------------------------------------------------------
# Fused encoder kernel: embedding (at layer 0) + n_layers x TSTEncoderLayer.
# Activation layout: two (TB, C*d_model) lane-dense f32 slabs (plane 0 = real,
# plane 1 = imag) resident in VMEM scratch across the layer grid axis.
# -----------------------------------------------------------------------------
def _encoder_kernel(xs_ref, wemb_ref, bemb_ref, rev_ref, perm_ref,
                    w1_ref, w2_ref, aux_ref, o_ref, y_ref, *, C, scale):
    layer = pl.program_id(1)
    Lh, D = wemb_ref.shape
    F = w1_ref.shape[2]

    @pl.when(layer == 0)
    def _embed():
        # complex nn.Linear(Lh, D).to(cfloat): zero imaginary weight/bias, so
        # the bias is added to the real plane only.  Done per channel with a
        # plain (Lh, D) weight (no kron(I_C, W) inflation).
        wemb = wemb_ref[...]                       # (Lh, D) bf16
        bemb = bemb_ref[...]                       # (1, D)  f32
        for p in range(2):
            xp = xs_ref[p]                         # (TB, C*Lh) bf16
            for c in range(C):
                yc = jnp.dot(xp[:, c * Lh:(c + 1) * Lh], wemb,
                             preferred_element_type=jnp.float32)
                if p == 0:
                    yc = yc + bemb
                y_ref[p, :, c * D:(c + 1) * D] = yc

    q_re = y_ref[0]                                # (TB, C*D) f32
    q_im = y_ref[1]

    # torch.flip(K, dims=[1,2]) == reversal of the flattened (C, D) lane axis.
    # With v_re = v_im = q_re and the reference's minus sign, the attention
    # output reduces exactly to:
    #   o_re = scale*(q_re+q_im) * rev(q_re-q_im) * q_re
    #   o_im = (q_re-q_im) * rev(scale*(q_re+q_im)) * q_re
    # (scale folded once; 2 reversals instead of 4 flips).
    sA = scale * (q_re + q_im)
    sB = q_re - q_im
    rev = rev_ref[...]                             # (CD, CD) bf16 anti-identity
    rB = jnp.dot(sB.astype(jnp.bfloat16), rev, preferred_element_type=jnp.float32)
    rA = jnp.dot(sA.astype(jnp.bfloat16), rev, preferred_element_type=jnp.float32)
    o_re = sA * rB * q_re
    o_im = sB * rA * q_re

    # output.transpose(1,2).contiguous().view(bs, -1, n_heads*d_v): a fixed
    # permutation of the flattened (C, D) lane axis -> one-hot bf16 matmul.
    perm = perm_ref[...]
    o_re = jnp.dot(o_re.astype(jnp.bfloat16), perm, preferred_element_type=jnp.float32)
    o_im = jnp.dot(o_im.astype(jnp.bfloat16), perm, preferred_element_type=jnp.float32)

    aux = aux_ref[0]                               # (6, max(D, F)) f32
    b1 = aux[0:1, :F]
    b2 = aux[1:2, :D]
    n1s = aux[2:3, :D]
    n1t = aux[3:4, :D]
    n2s = aux[4:5, :D]
    n2t = aux[5:6, :D]
    w1 = w1_ref[0]                                 # (D, F) bf16
    w2 = w2_ref[0]                                 # (F, D) bf16

    # Residual + BN + FF + residual + BN, per channel on plain weights.
    for p, (src, att) in enumerate(((q_re, o_re), (q_im, o_im))):
        for c in range(C):
            sl = slice(c * D, (c + 1) * D)
            x = src[:, sl] + att[:, sl]            # residual 1 (dropout = id)
            x = x * n1s + n1t                      # BatchNorm1d (eval, folded)
            h = jnp.dot(x.astype(jnp.bfloat16), w1,
                        preferred_element_type=jnp.float32) + b1
            h = _gelu_exact(h)
            ff = jnp.dot(h.astype(jnp.bfloat16), w2,
                         preferred_element_type=jnp.float32) + b2
            y = x + ff                             # residual 2
            y_ref[p, :, sl] = y * n2s + n2t        # BatchNorm1d (eval, folded)

    @pl.when(layer == pl.num_programs(1) - 1)
    def _writeback():
        o_ref[0] = y_ref[0]
        o_ref[1] = y_ref[1]


def _pick_batch_tile(B, C, D, Lh):
    """Largest batch tile (multiple of 8, <=512) fitting ~16 MiB of
    activation-dependent VMEM; >=2 tiles when B>=16 (v7x megacore)."""
    CD = C * D
    # f32 scratch (2*CD) + double-buffered f32 out (4*CD) + ~8 live f32 slabs
    # of attention temporaries + double-buffered bf16 xs, per batch row.
    per_row = 4 * CD * 14 + 4 * C * Lh + 512
    tb = ((16 * 1024 * 1024) // per_row) // 8 * 8
    tb = int(max(8, min(512, tb)))
    if B >= 16:
        tb = min(tb, ((B + 15) // 16) * 8)      # guarantee >= 2 batch tiles
    if B <= tb:
        tb = B                                  # single tile, no padding
    return tb


# -----------------------------------------------------------------------------
# Wrapper: parameter preprocessing (folded BN, packed per-layer vectors, bf16
# permutation matrices), one pallas_call, complex recombination.
# -----------------------------------------------------------------------------
def tsti_encoder_forward(x, params, *, n_heads):
    B, C, Lh = x.shape
    emb_w, emb_b = params["emb_w"], params["emb_b"]          # (Lh, D), (D,)
    w1, b1 = params["ff_w1"], params["ff_b1"]                # (nl, D, F), (nl, F)
    w2, b2 = params["ff_w2"], params["ff_b2"]                # (nl, F, D), (nl, D)
    nl, D, F = w1.shape
    assert D % n_heads == 0, f"d_model ({D}) must be divisible by n_heads ({n_heads})"
    CD, CLh = C * D, C * Lh
    eps = 1e-5
    scale = float((D // n_heads) ** -0.5)

    # ---- fold eval-mode BatchNorm1d into per-feature scale/shift (D lanes).
    def bn_fold(w, b, m, v):
        s = w * jax.lax.rsqrt(v + eps)
        return s, b - m * s

    bn1s, bn1t = bn_fold(params["bn1_w"], params["bn1_b"],
                         params["bn1_m"], params["bn1_v"])
    bn2s, bn2t = bn_fold(params["bn2_w"], params["bn2_b"],
                         params["bn2_m"], params["bn2_v"])

    # ---- pack the 6 per-layer small vectors into one (nl, 6, P) array.
    P = max(D, F)
    pad_lane = lambda a: jnp.pad(a, ((0, 0), (0, P - a.shape[1])))
    aux = jnp.stack([pad_lane(b1), pad_lane(b2), pad_lane(bn1s), pad_lane(bn1t),
                     pad_lane(bn2s), pad_lane(bn2t)], axis=1).astype(jnp.float32)

    # ---- static one-hot (bf16) lane-permutation matrices over flattened (C, D)
    f = np.arange(CD)
    perm_np = np.zeros((CD, CD), np.float32)
    perm_np[(f % C) * D + f // C, f] = 1.0               # transpose(1,2).view(...)
    perm_m = jnp.asarray(perm_np).astype(jnp.bfloat16)
    rev_m = jnp.asarray(np.eye(CD, dtype=np.float32)[::-1].copy()).astype(jnp.bfloat16)

    wemb = emb_w.astype(jnp.bfloat16)                    # (Lh, D) plain weight
    bemb = emb_b.reshape(1, D).astype(jnp.float32)
    w1b = w1.astype(jnp.bfloat16)                        # (nl, D, F) plain weight
    w2b = w2.astype(jnp.bfloat16)                        # (nl, F, D) plain weight

    # ---- batch tiling (padded to a multiple of the tile).
    TB = _pick_batch_tile(B, C, D, Lh)
    Bp = ((B + TB - 1) // TB) * TB
    n_b = Bp // TB

    # ---- pack complex input into bf16 real/imag slabs (2, Bp, C*Lh).
    xs = jnp.stack([jnp.real(x).reshape(B, CLh),
                    jnp.imag(x).reshape(B, CLh)], axis=0).astype(jnp.bfloat16)
    if Bp != B:
        xs = jnp.pad(xs, ((0, 0), (0, Bp - B), (0, 0)))

    const_spec = lambda shp: pl.BlockSpec(shp, lambda b, l: tuple(0 for _ in shp))
    layer_spec = lambda shp: pl.BlockSpec((1,) + shp, lambda b, l: (l, 0, 0))

    out = pl.pallas_call(
        functools.partial(_encoder_kernel, C=C, scale=scale),
        out_shape=jax.ShapeDtypeStruct((2, Bp, CD), jnp.float32),
        grid_spec=pltpu.PrefetchScalarGridSpec(
            num_scalar_prefetch=0,
            grid=(n_b, nl),
            in_specs=[
                pl.BlockSpec((2, TB, CLh), lambda b, l: (0, b, 0)),   # xs (bf16)
                const_spec((Lh, D)),                                  # wemb
                const_spec((1, D)),                                   # bemb
                const_spec((CD, CD)),                                 # rev (bf16)
                const_spec((CD, CD)),                                 # perm (bf16)
                layer_spec((D, F)),                                   # w1
                layer_spec((F, D)),                                   # w2
                layer_spec((6, P)),                                   # packed vectors
            ],
            out_specs=pl.BlockSpec((2, TB, CD), lambda b, l: (0, b, 0)),
            scratch_shapes=[pltpu.VMEM((2, TB, CD), jnp.float32)],
        ),
        compiler_params=pltpu.CompilerParams(
            dimension_semantics=("parallel", "arbitrary"),
            vmem_limit_bytes=32 * 1024 * 1024),
    )(xs, wemb, bemb, rev_m, perm_m, w1b, w2b, aux)

    # ---- torch.stack([y[:b], y[b:]], -1) -> view_as_complex
    y_re = out[0, :B].reshape(B, C, D)
    y_im = out[1, :B].reshape(B, C, D)
    return (y_re + 1j * y_im).astype(jnp.complex64)


# -----------------------------------------------------------------------------
# Pure-JAX reference (f32) of the PyTorch module, for self-validation.
# -----------------------------------------------------------------------------
def _reference_forward(x, params, *, n_heads):
    B, C, Lh = x.shape
    D = params["emb_w"].shape[1]
    nl = params["ff_w1"].shape[0]
    eps = 1e-5
    scale = (D // n_heads) ** -0.5

    def bn(z, w, b, m, v):
        s = w / jnp.sqrt(v + eps)
        return z * s + (b - m * s)

    yr = jnp.einsum("bcl,ld->bcd", jnp.real(x), params["emb_w"]) + params["emb_b"]
    yi = jnp.einsum("bcl,ld->bcd", jnp.imag(x), params["emb_w"])
    y = jnp.concatenate([yr, yi], axis=0)                     # (2B, C, D)
    for l in range(nl):
        q = y
        k = q[:, ::-1, ::-1]                                  # flip dims [1, 2]
        q_re, q_im = q[:B], q[B:]
        k_re, k_im = k[:B], k[B:]
        v_re = v_im = q_re                                    # reference aliasing
        a_re = scale * (q_re * k_re - q_im * k_im)
        a_im = scale * (q_re * k_im - q_im * k_re)            # minus, as in ref
        o = jnp.concatenate([a_re * v_re - a_im * v_im,
                             a_re * v_im + a_im * v_re], axis=0)
        o = jnp.transpose(o, (0, 2, 1)).reshape(2 * B, C, D)  # transpose+view
        src = bn(y + o, params["bn1_w"][l], params["bn1_b"][l],
                 params["bn1_m"][l], params["bn1_v"][l])
        h = jnp.einsum("bcd,df->bcf", src, params["ff_w1"][l]) + params["ff_b1"][l]
        h = jax.nn.gelu(h, approximate=False)
        ff = jnp.einsum("bcf,fd->bcd", h, params["ff_w2"][l]) + params["ff_b2"][l]
        y = bn(src + ff, params["bn2_w"][l], params["bn2_b"][l],
               params["bn2_m"][l], params["bn2_v"][l])
    return (y[:B] + 1j * y[B:]).astype(jnp.complex64)


# -----------------------------------------------------------------------------
# Parameter initialization (nn.Linear-style uniform init; BN eval defaults).
# -----------------------------------------------------------------------------
def init_params(key, Lh, d_model, d_ff, n_layers):
    keys = iter(jax.random.split(key, 2 + 4 * n_layers))

    def linear(fan_in, fan_out):
        bound = 1.0 / (fan_in ** 0.5)
        w = jax.random.uniform(next(keys), (fan_in, fan_out), jnp.float32,
                               -bound, bound)
        b = jax.random.uniform(next(keys), (fan_out,), jnp.float32, -bound, bound)
        return w, b

    emb_w, emb_b = linear(Lh, d_model)
    w1s, b1s, w2s, b2s = [], [], [], []
    for _ in range(n_layers):
        w1, b1 = linear(d_model, d_ff)
        w2, b2 = linear(d_ff, d_model)
        w1s.append(w1); b1s.append(b1); w2s.append(w2); b2s.append(b2)

    ones = jnp.ones((n_layers, d_model), jnp.float32)
    zeros = jnp.zeros((n_layers, d_model), jnp.float32)
    return dict(
        emb_w=emb_w, emb_b=emb_b,
        ff_w1=jnp.stack(w1s), ff_b1=jnp.stack(b1s),
        ff_w2=jnp.stack(w2s), ff_b2=jnp.stack(b2s),
        bn1_w=ones, bn1_b=zeros, bn1_m=zeros, bn1_v=ones,
        bn2_w=ones, bn2_b=zeros, bn2_m=zeros, bn2_v=ones,
    )


if __name__ == "__main__":
    # small shapes consistent with the module
    B, C = 2, 4                          # batch, channels
    context_window = 16
    Lh = context_window // 2 + 1         # 9: in_features of the cfloat embedding
    d_model, n_heads, d_ff = 32, 4, 64
    n_layers = 3

    key = jax.random.PRNGKey(0)
    kp, kr, ki = jax.random.split(key, 3)
    params = init_params(kp, Lh, d_model, d_ff, n_layers)
    x = (jax.random.normal(kr, (B, C, Lh), jnp.float32)
         + 1j * jax.random.normal(ki, (B, C, Lh), jnp.float32)).astype(jnp.complex64)

    fwd = jax.jit(functools.partial(tsti_encoder_forward, n_heads=n_heads))
    y = fwd(x, params)
    jax.block_until_ready(y)
    assert y.shape == (B, C, d_model) and y.dtype == jnp.complex64, (y.shape, y.dtype)

    # self-check against the pure-JAX reference (tolerance covers bf16 matmuls)
    y_ref = _reference_forward(x, params, n_heads=n_heads)
    err = float(jnp.max(jnp.abs(y - y_ref))) / (float(jnp.max(jnp.abs(y_ref))) + 1e-6)
    assert err < 5e-2, f"mismatch vs reference: rel-max err {err}"

    print("KERNEL_OK")
</pallas_src>

<mosaic_0001>
module attributes {stable_mosaic.version = 11 : i64} {
  func.func @_encoder_kernel(%arg0: i32, %arg1: i32, %arg2: memref<2x2x36xbf16, #tpu.memory_space<vmem>>, %arg3: memref<9x32xbf16, #tpu.memory_space<vmem>>, %arg4: memref<1x32xf32, #tpu.memory_space<vmem>>, %arg5: memref<128x128xbf16, #tpu.memory_space<vmem>>, %arg6: memref<128x128xbf16, #tpu.memory_space<vmem>>, %arg7: memref<1x32x64xbf16, #tpu.memory_space<vmem>>, %arg8: memref<1x64x32xbf16, #tpu.memory_space<vmem>>, %arg9: memref<1x6x64xf32, #tpu.memory_space<vmem>>, %arg10: memref<2x2x128xf32, #tpu.memory_space<vmem>>, %arg11: memref<2x2x128xf32, #tpu.memory_space<vmem>>) attributes {dimension_semantics = [#tpu.dimension_semantics<parallel>, #tpu.dimension_semantics<arbitrary>], iteration_bounds = array<i64: 1, 3>, scalar_prefetch = 0 : i64, scratch_operands = 1 : i64, tpu.core_type = #tpu.core_type<tc>, window_params = [{transform_indices = @transform_0, window_bounds = array<i64: 2, 2, 36>}, {pipeline_mode = #tpu.pipeline_mode<synchronous>, transform_indices = @transform_1, window_bounds = array<i64: 9, 32>}, {pipeline_mode = #tpu.pipeline_mode<synchronous>, transform_indices = @transform_2, window_bounds = array<i64: 1, 32>}, {pipeline_mode = #tpu.pipeline_mode<synchronous>, transform_indices = @transform_3, window_bounds = array<i64: 128, 128>}, {pipeline_mode = #tpu.pipeline_mode<synchronous>, transform_indices = @transform_4, window_bounds = array<i64: 128, 128>}, {transform_indices = @transform_5, window_bounds = array<i64: 1, 32, 64>}, {transform_indices = @transform_6, window_bounds = array<i64: 1, 64, 32>}, {transform_indices = @transform_7, window_bounds = array<i64: 1, 6, 64>}, {transform_indices = @transform_8, window_bounds = array<i64: 2, 2, 128>}]} {
    %c0_i32 = arith.constant 0 : i32
    %0 = arith.cmpi eq, %arg1, %c0_i32 : i32
    %1 = arith.extui %0 : i1 to i32
    %c0_i32_0 = arith.constant 0 : i32
    %2 = arith.cmpi ne, %1, %c0_i32_0 : i32
    scf.if %2 {
      %c0_180 = arith.constant 0 : index
      %c0_181 = arith.constant 0 : index
      %544 = vector.load %arg3[%c0_180, %c0_181] : memref<9x32xbf16, #tpu.memory_space<vmem>>, vector<9x32xbf16>
      %c0_182 = arith.constant 0 : index
      %c0_183 = arith.constant 0 : index
      %545 = vector.load %arg4[%c0_182, %c0_183] : memref<1x32xf32, #tpu.memory_space<vmem>>, vector<1x32xf32>
      %c0_184 = arith.constant 0 : index
      %c0_185 = arith.constant 0 : index
      %c0_186 = arith.constant 0 : index
      %546 = vector.load %arg2[%c0_184, %c0_185, %c0_186] : memref<2x2x36xbf16, #tpu.memory_space<vmem>>, vector<1x2x36xbf16>
      %547 = vector.shape_cast %546 : vector<1x2x36xbf16> to vector<2x36xbf16>
      %548 = vector.extract_strided_slice %547 {offsets = [0, 0], sizes = [2, 9], strides = [1, 1]} : vector<2x36xbf16> to vector<2x9xbf16>
      %cst_187 = arith.constant dense<0.000000e+00> : vector<2x32xf32>
      %549 = tpu.matmul %548, %544, %cst_187 {dimension_numbers = #tpu.dot_dimension_numbers<[1], [0], [0], [1], [0, 0, 1, 1], [], []>} : vector<2x9xbf16>, vector<9x32xbf16>, vector<2x32xf32> -> vector<2x32xf32>
      %550 = vector.broadcast %545 : vector<1x32xf32> to vector<2x32xf32>
      %551 = arith.addf %549, %550 : vector<2x32xf32>
      %c0_188 = arith.constant 0 : index
      %c0_189 = arith.constant 0 : index
      %c0_190 = arith.constant 0 : index
      %552 = vector.load %arg11[%c0_188, %c0_189, %c0_190] : memref<2x2x128xf32, #tpu.memory_space<vmem>>, vector<1x2x32xf32>
      %553 = vector.shape_cast %552 : vector<1x2x32xf32> to vector<2x32xf32>
      %554 = vector.shape_cast %551 : vector<2x32xf32> to vector<1x2x32xf32>
      tpu.vector_store %arg11[%c0_188, %c0_189, %c0_190], %554 {strides = array<i32>} : memref<2x2x128xf32, #tpu.memory_space<vmem>>, vector<1x2x32xf32>,
      %555 = vector.extract_strided_slice %547 {offsets = [0, 9], sizes = [2, 9], strides = [1, 1]} : vector<2x36xbf16> to vector<2x9xbf16>
      %cst_191 = arith.constant dense<0.000000e+00> : vector<2x32xf32>
      %556 = tpu.matmul %555, %544, %cst_191 {dimension_numbers = #tpu.dot_dimension_numbers<[1], [0], [0], [1], [0, 0, 1, 1], [], []>} : vector<2x9xbf16>, vector<9x32xbf16>, vector<2x32xf32> -> vector<2x32xf32>
      %557 = vector.broadcast %545 : vector<1x32xf32> to vector<2x32xf32>
      %558 = arith.addf %556, %557 : vector<2x32xf32>
      %c0_192 = arith.constant 0 : index
      %c0_193 = arith.constant 0 : index
      %c32_194 = arith.constant 32 : index
      %559 = vector.load %arg11[%c0_192, %c0_193, %c32_194] : memref<2x2x128xf32, #tpu.memory_space<vmem>>, vector<1x2x32xf32>
      %560 = vector.shape_cast %559 : vector<1x2x32xf32> to vector<2x32xf32>
      %561 = vector.shape_cast %558 : vector<2x32xf32> to vector<1x2x32xf32>
      tpu.vector_store %arg11[%c0_192, %c0_193, %c32_194], %561 {strides = array<i32>} : memref<2x2x128xf32, #tpu.memory_space<vmem>>, vector<1x2x32xf32>,
      %562 = vector.extract_strided_slice %547 {offsets = [0, 18], sizes = [2, 9], strides = [1, 1]} : vector<2x36xbf16> to vector<2x9xbf16>
      %cst_195 = arith.constant dense<0.000000e+00> : vector<2x32xf32>
      %563 = tpu.matmul %562, %544, %cst_195 {dimension_numbers = #tpu.dot_dimension_numbers<[1], [0], [0], [1], [0, 0, 1, 1], [], []>} : vector<2x9xbf16>, vector<9x32xbf16>, vector<2x32xf32> -> vector<2x32xf32>
      %564 = vector.broadcast %545 : vector<1x32xf32> to vector<2x32xf32>
      %565 = arith.addf %563, %564 : vector<2x32xf32>
      %c0_196 = arith.constant 0 : index
      %c0_197 = arith.constant 0 : index
      %c64_198 = arith.constant 64 : index
      %566 = vector.load %arg11[%c0_196, %c0_197, %c64_198] : memref<2x2x128xf32, #tpu.memory_space<vmem>>, vector<1x2x32xf32>
      %567 = vector.shape_cast %566 : vector<1x2x32xf32> to vector<2x32xf32>
      %568 = vector.shape_cast %565 : vector<2x32xf32> to vector<1x2x32xf32>
      tpu.vector_store %arg11[%c0_196, %c0_197, %c64_198], %568 {strides = array<i32>} : memref<2x2x128xf32, #tpu.memory_space<vmem>>, vector<1x2x32xf32>,
      %569 = vector.extract_strided_slice %547 {offsets = [0, 27], sizes = [2, 9], strides = [1, 1]} : vector<2x36xbf16> to vector<2x9xbf16>
      %cst_199 = arith.constant dense<0.000000e+00> : vector<2x32xf32>
      %570 = tpu.matmul %569, %544, %cst_199 {dimension_numbers = #tpu.dot_dimension_numbers<[1], [0], [0], [1], [0, 0, 1, 1], [], []>} : vector<2x9xbf16>, vector<9x32xbf16>, vector<2x32xf32> -> vector<2x32xf32>
      %571 = vector.broadcast %545 : vector<1x32xf32> to vector<2x32xf32>
      %572 = arith.addf %570, %571 : vector<2x32xf32>
      %c0_200 = arith.constant 0 : index
      %c0_201 = arith.constant 0 : index
      %c96_202 = arith.constant 96 : index
      %573 = vector.load %arg11[%c0_200, %c0_201, %c96_202] : memref<2x2x128xf32, #tpu.memory_space<vmem>>, vector<1x2x32xf32>
      %574 = vector.shape_cast %573 : vector<1x2x32xf32> to vector<2x32xf32>
      %575 = vector.shape_cast %572 : vector<2x32xf32> to vector<1x2x32xf32>
      tpu.vector_store %arg11[%c0_200, %c0_201, %c96_202], %575 {strides = array<i32>} : memref<2x2x128xf32, #tpu.memory_space<vmem>>, vector<1x2x32xf32>,
      %c1_203 = arith.constant 1 : index
      %c0_204 = arith.constant 0 : index
      %c0_205 = arith.constant 0 : index
      %576 = vector.load %arg2[%c1_203, %c0_204, %c0_205] : memref<2x2x36xbf16, #tpu.memory_space<vmem>>, vector<1x2x36xbf16>
      %577 = vector.shape_cast %576 : vector<1x2x36xbf16> to vector<2x36xbf16>
      %578 = vector.extract_strided_slice %577 {offsets = [0, 0], sizes = [2, 9], strides = [1, 1]} : vector<2x36xbf16> to vector<2x9xbf16>
      %cst_206 = arith.constant dense<0.000000e+00> : vector<2x32xf32>
      %579 = tpu.matmul %578, %544, %cst_206 {dimension_numbers = #tpu.dot_dimension_numbers<[1], [0], [0], [1], [0, 0, 1, 1], [], []>} : vector<2x9xbf16>, vector<9x32xbf16>, vector<2x32xf32> -> vector<2x32xf32>
      %c1_207 = arith.constant 1 : index
      %c0_208 = arith.constant 0 : index
      %c0_209 = arith.constant 0 : index
      %580 = vector.load %arg11[%c1_207, %c0_208, %c0_209] : memref<2x2x128xf32, #tpu.memory_space<vmem>>, vector<1x2x32xf32>
      %581 = vector.shape_cast %580 : vector<1x2x32xf32> to vector<2x32xf32>
      %582 = vector.shape_cast %579 : vector<2x32xf32> to vector<1x2x32xf32>
      tpu.vector_store %arg11[%c1_207, %c0_208, %c0_209], %582 {strides = array<i32>} : memref<2x2x128xf32, #tpu.memory_space<vmem>>, vector<1x2x32xf32>,
      %583 = vector.extract_strided_slice %577 {offsets = [0, 9], sizes = [2, 9], strides = [1, 1]} : vector<2x36xbf16> to vector<2x9xbf16>
      %cst_210 = arith.constant dense<0.000000e+00> : vector<2x32xf32>
      %584 = tpu.matmul %583, %544, %cst_210 {dimension_numbers = #tpu.dot_dimension_numbers<[1], [0], [0], [1], [0, 0, 1, 1], [], []>} : vector<2x9xbf16>, vector<9x32xbf16>, vector<2x32xf32> -> vector<2x32xf32>
      %c1_211 = arith.constant 1 : index
      %c0_212 = arith.constant 0 : index
      %c32_213 = arith.constant 32 : index
      %585 = vector.load %arg11[%c1_211, %c0_212, %c32_213] : memref<2x2x128xf32, #tpu.memory_space<vmem>>, vector<1x2x32xf32>
      %586 = vector.shape_cast %585 : vector<1x2x32xf32> to vector<2x32xf32>
      %587 = vector.shape_cast %584 : vector<2x32xf32> to vector<1x2x32xf32>
      tpu.vector_store %arg11[%c1_211, %c0_212, %c32_213], %587 {strides = array<i32>} : memref<2x2x128xf32, #tpu.memory_space<vmem>>, vector<1x2x32xf32>,
      %588 = vector.extract_strided_slice %577 {offsets = [0, 18], sizes = [2, 9], strides = [1, 1]} : vector<2x36xbf16> to vector<2x9xbf16>
      %cst_214 = arith.constant dense<0.000000e+00> : vector<2x32xf32>
      %589 = tpu.matmul %588, %544, %cst_214 {dimension_numbers = #tpu.dot_dimension_numbers<[1], [0], [0], [1], [0, 0, 1, 1], [], []>} : vector<2x9xbf16>, vector<9x32xbf16>, vector<2x32xf32> -> vector<2x32xf32>
      %c1_215 = arith.constant 1 : index
      %c0_216 = arith.constant 0 : index
      %c64_217 = arith.constant 64 : index
      %590 = vector.load %arg11[%c1_215, %c0_216, %c64_217] : memref<2x2x128xf32, #tpu.memory_space<vmem>>, vector<1x2x32xf32>
      %591 = vector.shape_cast %590 : vector<1x2x32xf32> to vector<2x32xf32>
      %592 = vector.shape_cast %589 : vector<2x32xf32> to vector<1x2x32xf32>
      tpu.vector_store %arg11[%c1_215, %c0_216, %c64_217], %592 {strides = array<i32>} : memref<2x2x128xf32, #tpu.memory_space<vmem>>, vector<1x2x32xf32>,
      %593 = vector.extract_strided_slice %577 {offsets = [0, 27], sizes = [2, 9], strides = [1, 1]} : vector<2x36xbf16> to vector<2x9xbf16>
      %cst_218 = arith.constant dense<0.000000e+00> : vector<2x32xf32>
      %594 = tpu.matmul %593, %544, %cst_218 {dimension_numbers = #tpu.dot_dimension_numbers<[1], [0], [0], [1], [0, 0, 1, 1], [], []>} : vector<2x9xbf16>, vector<9x32xbf16>, vector<2x32xf32> -> vector<2x32xf32>
      %c1_219 = arith.constant 1 : index
      %c0_220 = arith.constant 0 : index
      %c96_221 = arith.constant 96 : index
      %595 = vector.load %arg11[%c1_219, %c0_220, %c96_221] : memref<2x2x128xf32, #tpu.memory_space<vmem>>, vector<1x2x32xf32>
      %596 = vector.shape_cast %595 : vector<1x2x32xf32> to vector<2x32xf32>
      %597 = vector.shape_cast %594 : vector<2x32xf32> to vector<1x2x32xf32>
      tpu.vector_store %arg11[%c1_219, %c0_220, %c96_221], %597 {strides = array<i32>} : memref<2x2x128xf32, #tpu.memory_space<vmem>>, vector<1x2x32xf32>,
    } else {
    }
    %c0 = arith.constant 0 : index
    %c0_1 = arith.constant 0 : index
    %c0_2 = arith.constant 0 : index
    %3 = vector.load %arg11[%c0, %c0_1, %c0_2] : memref<2x2x128xf32, #tpu.memory_space<vmem>>, vector<1x2x128xf32>
    %4 = vector.shape_cast %3 : vector<1x2x128xf32> to vector<2x128xf32>
    %c1 = arith.constant 1 : index
    %c0_3 = arith.constant 0 : index
    %c0_4 = arith.constant 0 : index
    %5 = vector.load %arg11[%c1, %c0_3, %c0_4] : memref<2x2x128xf32, #tpu.memory_space<vmem>>, vector<1x2x128xf32>
    %6 = vector.shape_cast %5 : vector<1x2x128xf32> to vector<2x128xf32>
    %7 = arith.addf %4, %6 : vector<2x128xf32>
    %cst = arith.constant 0.353553385 : f32
    %8 = vector.broadcast %cst : f32 to vector<2x128xf32>
    %9 = arith.mulf %8, %7 : vector<2x128xf32>
    %10 = arith.subf %4, %6 : vector<2x128xf32>
    %c0_5 = arith.constant 0 : index
    %c0_6 = arith.constant 0 : index
    %11 = vector.load %arg5[%c0_5, %c0_6] : memref<128x128xbf16, #tpu.memory_space<vmem>>, vector<128x128xbf16>
    %12 = arith.truncf %10 : vector<2x128xf32> to vector<2x128xbf16>
    %cst_7 = arith.constant dense<0.000000e+00> : vector<2x128xf32>
    %13 = tpu.matmul %12, %11, %cst_7 {dimension_numbers = #tpu.dot_dimension_numbers<[1], [0], [0], [1], [0, 0, 1, 1], [], []>} : vector<2x128xbf16>, vector<128x128xbf16>, vector<2x128xf32> -> vector<2x128xf32>
    %14 = arith.truncf %9 : vector<2x128xf32> to vector<2x128xbf16>
    %cst_8 = arith.constant dense<0.000000e+00> : vector<2x128xf32>
    %15 = tpu.matmul %14, %11, %cst_8 {dimension_numbers = #tpu.dot_dimension_numbers<[1], [0], [0], [1], [0, 0, 1, 1], [], []>} : vector<2x128xbf16>, vector<128x128xbf16>, vector<2x128xf32> -> vector<2x128xf32>
    %16 = arith.mulf %9, %13 : vector<2x128xf32>
    %17 = arith.mulf %16, %4 : vector<2x128xf32>
    %18 = arith.mulf %10, %15 : vector<2x128xf32>
    %19 = arith.mulf %18, %4 : vector<2x128xf32>
    %c0_9 = arith.constant 0 : index
    %c0_10 = arith.constant 0 : index
    %20 = vector.load %arg6[%c0_9, %c0_10] : memref<128x128xbf16, #tpu.memory_space<vmem>>, vector<128x128xbf16>
    %21 = arith.truncf %17 : vector<2x128xf32> to vector<2x128xbf16>
    %cst_11 = arith.constant dense<0.000000e+00> : vector<2x128xf32>
    %22 = tpu.matmul %21, %20, %cst_11 {dimension_numbers = #tpu.dot_dimension_numbers<[1], [0], [0], [1], [0, 0, 1, 1], [], []>} : vector<2x128xbf16>, vector<128x128xbf16>, vector<2x128xf32> -> vector<2x128xf32>
    %23 = arith.truncf %19 : vector<2x128xf32> to vector<2x128xbf16>
    %cst_12 = arith.constant dense<0.000000e+00> : vector<2x128xf32>
    %24 = tpu.matmul %23, %20, %cst_12 {dimension_numbers = #tpu.dot_dimension_numbers<[1], [0], [0], [1], [0, 0, 1, 1], [], []>} : vector<2x128xbf16>, vector<128x128xbf16>, vector<2x128xf32> -> vector<2x128xf32>
    %c0_13 = arith.constant 0 : index
    %c0_14 = arith.constant 0 : index
    %c0_15 = arith.constant 0 : index
    %25 = vector.load %arg9[%c0_13, %c0_14, %c0_15] : memref<1x6x64xf32, #tpu.memory_space<vmem>>, vector<1x6x64xf32>
    %26 = vector.shape_cast %25 : vector<1x6x64xf32> to vector<6x64xf32>
    %27 = vector.extract_strided_slice %26 {offsets = [0, 0], sizes = [1, 64], strides = [1, 1]} : vector<6x64xf32> to vector<1x64xf32>
    %28 = vector.extract_strided_slice %26 {offsets = [1, 0], sizes = [1, 32], strides = [1, 1]} : vector<6x64xf32> to vector<1x32xf32>
    %29 = vector.extract_strided_slice %26 {offsets = [2, 0], sizes = [1, 32], strides = [1, 1]} : vector<6x64xf32> to vector<1x32xf32>
    %30 = vector.extract_strided_slice %26 {offsets = [3, 0], sizes = [1, 32], strides = [1, 1]} : vector<6x64xf32> to vector<1x32xf32>
    %31 = vector.extract_strided_slice %26 {offsets = [4, 0], sizes = [1, 32], strides = [1, 1]} : vector<6x64xf32> to vector<1x32xf32>
    %32 = vector.extract_strided_slice %26 {offsets = [5, 0], sizes = [1, 32], strides = [1, 1]} : vector<6x64xf32> to vector<1x32xf32>
    %c0_16 = arith.constant 0 : index
    %c0_17 = arith.constant 0 : index
    %c0_18 = arith.constant 0 : index
    %33 = vector.load %arg7[%c0_16, %c0_17, %c0_18] : memref<1x32x64xbf16, #tpu.memory_space<vmem>>, vector<1x32x64xbf16>
    %34 = vector.shape_cast %33 : vector<1x32x64xbf16> to vector<32x64xbf16>
    %c0_19 = arith.constant 0 : index
    %c0_20 = arith.constant 0 : index
    %c0_21 = arith.constant 0 : index
    %35 = vector.load %arg8[%c0_19, %c0_20, %c0_21] : memref<1x64x32xbf16, #tpu.memory_space<vmem>>, vector<1x64x32xbf16>
    %36 = vector.shape_cast %35 : vector<1x64x32xbf16> to vector<64x32xbf16>
    %37 = vector.extract_strided_slice %4 {offsets = [0, 0], sizes = [2, 32], strides = [1, 1]} : vector<2x128xf32> to vector<2x32xf32>
    %38 = vector.extract_strided_slice %22 {offsets = [0, 0], sizes = [2, 32], strides = [1, 1]} : vector<2x128xf32> to vector<2x32xf32>
    %39 = arith.addf %37, %38 : vector<2x32xf32>
    %40 = vector.broadcast %29 : vector<1x32xf32> to vector<2x32xf32>
    %41 = arith.mulf %39, %40 : vector<2x32xf32>
    %42 = vector.broadcast %30 : vector<1x32xf32> to vector<2x32xf32>
    %43 = arith.addf %41, %42 : vector<2x32xf32>
    %44 = arith.truncf %43 : vector<2x32xf32> to vector<2x32xbf16>
    %cst_22 = arith.constant dense<0.000000e+00> : vector<2x64xf32>
    %45 = tpu.matmul %44, %34, %cst_22 {dimension_numbers = #tpu.dot_dimension_numbers<[1], [0], [0], [1], [0, 0, 1, 1], [], []>} : vector<2x32xbf16>, vector<32x64xbf16>, vector<2x64xf32> -> vector<2x64xf32>
    %46 = vector.broadcast %27 : vector<1x64xf32> to vector<2x64xf32>
    %47 = arith.addf %45, %46 : vector<2x64xf32>
    %cst_23 = arith.constant 0.707106769 : f32
    %48 = vector.broadcast %cst_23 : f32 to vector<2x64xf32>
    %49 = arith.mulf %47, %48 : vector<2x64xf32>
    %50 = math.absf %49 : vector<2x64xf32>
    %cst_24 = arith.constant 0.327591091 : f32
    %51 = vector.broadcast %cst_24 : f32 to vector<2x64xf32>
    %52 = arith.mulf %51, %50 : vector<2x64xf32>
    %cst_25 = arith.constant 1.000000e+00 : f32
    %53 = vector.broadcast %cst_25 : f32 to vector<2x64xf32>
    %54 = arith.addf %53, %52 : vector<2x64xf32>
    %cst_26 = arith.constant 1.000000e+00 : f32
    %55 = vector.broadcast %cst_26 : f32 to vector<2x64xf32>
    %56 = arith.divf %55, %54 : vector<2x64xf32>
    %cst_27 = arith.constant 1.06140542 : f32
    %57 = vector.broadcast %cst_27 : f32 to vector<2x64xf32>
    %58 = arith.mulf %56, %57 : vector<2x64xf32>
    %cst_28 = arith.constant -1.45315206 : f32
    %59 = vector.broadcast %cst_28 : f32 to vector<2x64xf32>
    %60 = arith.addf %59, %58 : vector<2x64xf32>
    %61 = arith.mulf %56, %60 : vector<2x64xf32>
    %cst_29 = arith.constant 1.42141378 : f32
    %62 = vector.broadcast %cst_29 : f32 to vector<2x64xf32>
    %63 = arith.addf %62, %61 : vector<2x64xf32>
    %64 = arith.mulf %56, %63 : vector<2x64xf32>
    %cst_30 = arith.constant -0.284496725 : f32
    %65 = vector.broadcast %cst_30 : f32 to vector<2x64xf32>
    %66 = arith.addf %65, %64 : vector<2x64xf32>
    %67 = arith.mulf %56, %66 : vector<2x64xf32>
    %cst_31 = arith.constant 0.254829586 : f32
    %68 = vector.broadcast %cst_31 : f32 to vector<2x64xf32>
    %69 = arith.addf %68, %67 : vector<2x64xf32>
    %70 = arith.mulf %56, %69 : vector<2x64xf32>
    %cst_32 = arith.constant 0.000000e+00 : f32
    %71 = vector.broadcast %cst_32 : f32 to vector<2x64xf32>
    %72 = arith.subf %71, %50 : vector<2x64xf32>
    %73 = arith.mulf %72, %50 : vector<2x64xf32>
    %74 = math.exp %73 : vector<2x64xf32>
    %75 = arith.mulf %70, %74 : vector<2x64xf32>
    %cst_33 = arith.constant 1.000000e+00 : f32
    %76 = vector.broadcast %cst_33 : f32 to vector<2x64xf32>
    %77 = arith.subf %76, %75 : vector<2x64xf32>
    %cst_34 = arith.constant 0.000000e+00 : f32
    %78 = vector.broadcast %cst_34 : f32 to vector<2x64xf32>
    %79 = arith.cmpf olt, %49, %78 : vector<2x64xf32>
    %cst_35 = arith.constant 0.000000e+00 : f32
    %80 = vector.broadcast %cst_35 : f32 to vector<2x64xf32>
    %81 = arith.subf %80, %77 : vector<2x64xf32>
    %82 = arith.select %79, %81, %77 : vector<2x64xi1>, vector<2x64xf32>
    %cst_36 = arith.constant 5.000000e-01 : f32
    %83 = vector.broadcast %cst_36 : f32 to vector<2x64xf32>
    %84 = arith.mulf %83, %47 : vector<2x64xf32>
    %cst_37 = arith.constant 1.000000e+00 : f32
    %85 = vector.broadcast %cst_37 : f32 to vector<2x64xf32>
    %86 = arith.addf %85, %82 : vector<2x64xf32>
    %87 = arith.mulf %84, %86 : vector<2x64xf32>
    %88 = arith.truncf %87 : vector<2x64xf32> to vector<2x64xbf16>
    %cst_38 = arith.constant dense<0.000000e+00> : vector<2x32xf32>
    %89 = tpu.matmul %88, %36, %cst_38 {dimension_numbers = #tpu.dot_dimension_numbers<[1], [0], [0], [1], [0, 0, 1, 1], [], []>} : vector<2x64xbf16>, vector<64x32xbf16>, vector<2x32xf32> -> vector<2x32xf32>
    %90 = vector.broadcast %28 : vector<1x32xf32> to vector<2x32xf32>
    %91 = arith.addf %89, %90 : vector<2x32xf32>
    %92 = arith.addf %43, %91 : vector<2x32xf32>
    %93 = vector.broadcast %31 : vector<1x32xf32> to vector<2x32xf32>
    %94 = arith.mulf %92, %93 : vector<2x32xf32>
    %95 = vector.broadcast %32 : vector<1x32xf32> to vector<2x32xf32>
    %96 = arith.addf %94, %95 : vector<2x32xf32>
    %c0_39 = arith.constant 0 : index
    %c0_40 = arith.constant 0 : index
    %c0_41 = arith.constant 0 : index
    %97 = vector.load %arg11[%c0_39, %c0_40, %c0_41] : memref<2x2x128xf32, #tpu.memory_space<vmem>>, vector<1x2x32xf32>
    %98 = vector.shape_cast %97 : vector<1x2x32xf32> to vector<2x32xf32>
    %99 = vector.shape_cast %96 : vector<2x32xf32> to vector<1x2x32xf32>
    tpu.vector_store %arg11[%c0_39, %c0_40, %c0_41], %99 {strides = array<i32>} : memref<2x2x128xf32, #tpu.memory_space<vmem>>, vector<1x2x32xf32>,
    %100 = vector.extract_strided_slice %4 {offsets = [0, 32], sizes = [2, 32], strides = [1, 1]} : vector<2x128xf32> to vector<2x32xf32>
    %101 = vector.extract_strided_slice %22 {offsets = [0, 32], sizes = [2, 32], strides = [1, 1]} : vector<2x128xf32> to vector<2x32xf32>
    %102 = arith.addf %100, %101 : vector<2x32xf32>
    %103 = vector.broadcast %29 : vector<1x32xf32> to vector<2x32xf32>
    %104 = arith.mulf %102, %103 : vector<2x32xf32>
    %105 = vector.broadcast %30 : vector<1x32xf32> to vector<2x32xf32>
    %106 = arith.addf %104, %105 : vector<2x32xf32>
    %107 = arith.truncf %106 : vector<2x32xf32> to vector<2x32xbf16>
    %cst_42 = arith.constant dense<0.000000e+00> : vector<2x64xf32>
    %108 = tpu.matmul %107, %34, %cst_42 {dimension_numbers = #tpu.dot_dimension_numbers<[1], [0], [0], [1], [0, 0, 1, 1], [], []>} : vector<2x32xbf16>, vector<32x64xbf16>, vector<2x64xf32> -> vector<2x64xf32>
    %109 = vector.broadcast %27 : vector<1x64xf32> to vector<2x64xf32>
    %110 = arith.addf %108, %109 : vector<2x64xf32>
    %cst_43 = arith.constant 0.707106769 : f32
    %111 = vector.broadcast %cst_43 : f32 to vector<2x64xf32>
    %112 = arith.mulf %110, %111 : vector<2x64xf32>
    %113 = math.absf %112 : vector<2x64xf32>
    %cst_44 = arith.constant 0.327591091 : f32
    %114 = vector.broadcast %cst_44 : f32 to vector<2x64xf32>
    %115 = arith.mulf %114, %113 : vector<2x64xf32>
    %cst_45 = arith.constant 1.000000e+00 : f32
    %116 = vector.broadcast %cst_45 : f32 to vector<2x64xf32>
    %117 = arith.addf %116, %115 : vector<2x64xf32>
    %cst_46 = arith.constant 1.000000e+00 : f32
    %118 = vector.broadcast %cst_46 : f32 to vector<2x64xf32>
    %119 = arith.divf %118, %117 : vector<2x64xf32>
    %cst_47 = arith.constant 1.06140542 : f32
    %120 = vector.broadcast %cst_47 : f32 to vector<2x64xf32>
    %121 = arith.mulf %119, %120 : vector<2x64xf32>
    %cst_48 = arith.constant -1.45315206 : f32
    %122 = vector.broadcast %cst_48 : f32 to vector<2x64xf32>
    %123 = arith.addf %122, %121 : vector<2x64xf32>
    %124 = arith.mulf %119, %123 : vector<2x64xf32>
    %cst_49 = arith.constant 1.42141378 : f32
    %125 = vector.broadcast %cst_49 : f32 to vector<2x64xf32>
    %126 = arith.addf %125, %124 : vector<2x64xf32>
    %127 = arith.mulf %119, %126 : vector<2x64xf32>
    %cst_50 = arith.constant -0.284496725 : f32
    %128 = vector.broadcast %cst_50 : f32 to vector<2x64xf32>
    %129 = arith.addf %128, %127 : vector<2x64xf32>
    %130 = arith.mulf %119, %129 : vector<2x64xf32>
    %cst_51 = arith.constant 0.254829586 : f32
    %131 = vector.broadcast %cst_51 : f32 to vector<2x64xf32>
    %132 = arith.addf %131, %130 : vector<2x64xf32>
    %133 = arith.mulf %119, %132 : vector<2x64xf32>
    %cst_52 = arith.constant 0.000000e+00 : f32
    %134 = vector.broadcast %cst_52 : f32 to vector<2x64xf32>
    %135 = arith.subf %134, %113 : vector<2x64xf32>
    %136 = arith.mulf %135, %113 : vector<2x64xf32>
    %137 = math.exp %136 : vector<2x64xf32>
    %138 = arith.mulf %133, %137 : vector<2x64xf32>
    %cst_53 = arith.constant 1.000000e+00 : f32
    %139 = vector.broadcast %cst_53 : f32 to vector<2x64xf32>
    %140 = arith.subf %139, %138 : vector<2x64xf32>
    %cst_54 = arith.constant 0.000000e+00 : f32
    %141 = vector.broadcast %cst_54 : f32 to vector<2x64xf32>
    %142 = arith.cmpf olt, %112, %141 : vector<2x64xf32>
    %cst_55 = arith.constant 0.000000e+00 : f32
    %143 = vector.broadcast %cst_55 : f32 to vector<2x64xf32>
    %144 = arith.subf %143, %140 : vector<2x64xf32>
    %145 = arith.select %142, %144, %140 : vector<2x64xi1>, vector<2x64xf32>
    %cst_56 = arith.constant 5.000000e-01 : f32
    %146 = vector.broadcast %cst_56 : f32 to vector<2x64xf32>
    %147 = arith.mulf %146, %110 : vector<2x64xf32>
    %cst_57 = arith.constant 1.000000e+00 : f32
    %148 = vector.broadcast %cst_57 : f32 to vector<2x64xf32>
    %149 = arith.addf %148, %145 : vector<2x64xf32>
    %150 = arith.mulf %147, %149 : vector<2x64xf32>
    %151 = arith.truncf %150 : vector<2x64xf32> to vector<2x64xbf16>
    %cst_58 = arith.constant dense<0.000000e+00> : vector<2x32xf32>
    %152 = tpu.matmul %151, %36, %cst_58 {dimension_numbers = #tpu.dot_dimension_numbers<[1], [0], [0], [1], [0, 0, 1, 1], [], []>} : vector<2x64xbf16>, vector<64x32xbf16>, vector<2x32xf32> -> vector<2x32xf32>
    %153 = vector.broadcast %28 : vector<1x32xf32> to vector<2x32xf32>
    %154 = arith.addf %152, %153 : vector<2x32xf32>
    %155 = arith.addf %106, %154 : vector<2x32xf32>
    %156 = vector.broadcast %31 : vector<1x32xf32> to vector<2x32xf32>
    %157 = arith.mulf %155, %156 : vector<2x32xf32>
    %158 = vector.broadcast %32 : vector<1x32xf32> to vector<2x32xf32>
    %159 = arith.addf %157, %158 : vector<2x32xf32>
    %c0_59 = arith.constant 0 : index
    %c0_60 = arith.constant 0 : index
    %c32 = arith.constant 32 : index
    %160 = vector.load %arg11[%c0_59, %c0_60, %c32] : memref<2x2x128xf32, #tpu.memory_space<vmem>>, vector<1x2x32xf32>
    %161 = vector.shape_cast %160 : vector<1x2x32xf32> to vector<2x32xf32>
    %162 = vector.shape_cast %159 : vector<2x32xf32> to vector<1x2x32xf32>
    tpu.vector_store %arg11[%c0_59, %c0_60, %c32], %162 {strides = array<i32>} : memref<2x2x128xf32, #tpu.memory_space<vmem>>, vector<1x2x32xf32>,
    %163 = vector.extract_strided_slice %4 {offsets = [0, 64], sizes = [2, 32], strides = [1, 1]} : vector<2x128xf32> to vector<2x32xf32>
    %164 = vector.extract_strided_slice %22 {offsets = [0, 64], sizes = [2, 32], strides = [1, 1]} : vector<2x128xf32> to vector<2x32xf32>
    %165 = arith.addf %163, %164 : vector<2x32xf32>
    %166 = vector.broadcast %29 : vector<1x32xf32> to vector<2x32xf32>
    %167 = arith.mulf %165, %166 : vector<2x32xf32>
    %168 = vector.broadcast %30 : vector<1x32xf32> to vector<2x32xf32>
    %169 = arith.addf %167, %168 : vector<2x32xf32>
    %170 = arith.truncf %169 : vector<2x32xf32> to vector<2x32xbf16>
    %cst_61 = arith.constant dense<0.000000e+00> : vector<2x64xf32>
    %171 = tpu.matmul %170, %34, %cst_61 {dimension_numbers = #tpu.dot_dimension_numbers<[1], [0], [0], [1], [0, 0, 1, 1], [], []>} : vector<2x32xbf16>, vector<32x64xbf16>, vector<2x64xf32> -> vector<2x64xf32>
    %172 = vector.broadcast %27 : vector<1x64xf32> to vector<2x64xf32>
    %173 = arith.addf %171, %172 : vector<2x64xf32>
    %cst_62 = arith.constant 0.707106769 : f32
    %174 = vector.broadcast %cst_62 : f32 to vector<2x64xf32>
    %175 = arith.mulf %173, %174 : vector<2x64xf32>
    %176 = math.absf %175 : vector<2x64xf32>
    %cst_63 = arith.constant 0.327591091 : f32
    %177 = vector.broadcast %cst_63 : f32 to vector<2x64xf32>
    %178 = arith.mulf %177, %176 : vector<2x64xf32>
    %cst_64 = arith.constant 1.000000e+00 : f32
    %179 = vector.broadcast %cst_64 : f32 to vector<2x64xf32>
    %180 = arith.addf %179, %178 : vector<2x64xf32>
    %cst_65 = arith.constant 1.000000e+00 : f32
    %181 = vector.broadcast %cst_65 : f32 to vector<2x64xf32>
    %182 = arith.divf %181, %180 : vector<2x64xf32>
    %cst_66 = arith.constant 1.06140542 : f32
    %183 = vector.broadcast %cst_66 : f32 to vector<2x64xf32>
    %184 = arith.mulf %182, %183 : vector<2x64xf32>
    %cst_67 = arith.constant -1.45315206 : f32
    %185 = vector.broadcast %cst_67 : f32 to vector<2x64xf32>
    %186 = arith.addf %185, %184 : vector<2x64xf32>
    %187 = arith.mulf %182, %186 : vector<2x64xf32>
    %cst_68 = arith.constant 1.42141378 : f32
    %188 = vector.broadcast %cst_68 : f32 to vector<2x64xf32>
    %189 = arith.addf %188, %187 : vector<2x64xf32>
    %190 = arith.mulf %182, %189 : vector<2x64xf32>
    %cst_69 = arith.constant -0.284496725 : f32
    %191 = vector.broadcast %cst_69 : f32 to vector<2x64xf32>
    %192 = arith.addf %191, %190 : vector<2x64xf32>
    %193 = arith.mulf %182, %192 : vector<2x64xf32>
    %cst_70 = arith.constant 0.254829586 : f32
    %194 = vector.broadcast %cst_70 : f32 to vector<2x64xf32>
    %195 = arith.addf %194, %193 : vector<2x64xf32>
    %196 = arith.mulf %182, %195 : vector<2x64xf32>
    %cst_71 = arith.constant 0.000000e+00 : f32
    %197 = vector.broadcast %cst_71 : f32 to vector<2x64xf32>
    %198 = arith.subf %197, %176 : vector<2x64xf32>
    %199 = arith.mulf %198, %176 : vector<2x64xf32>
    %200 = math.exp %199 : vector<2x64xf32>
    %201 = arith.mulf %196, %200 : vector<2x64xf32>
    %cst_72 = arith.constant 1.000000e+00 : f32
    %202 = vector.broadcast %cst_72 : f32 to vector<2x64xf32>
    %203 = arith.subf %202, %201 : vector<2x64xf32>
    %cst_73 = arith.constant 0.000000e+00 : f32
    %204 = vector.broadcast %cst_73 : f32 to vector<2x64xf32>
    %205 = arith.cmpf olt, %175, %204 : vector<2x64xf32>
    %cst_74 = arith.constant 0.000000e+00 : f32
    %206 = vector.broadcast %cst_74 : f32 to vector<2x64xf32>
    %207 = arith.subf %206, %203 : vector<2x64xf32>
    %208 = arith.select %205, %207, %203 : vector<2x64xi1>, vector<2x64xf32>
    %cst_75 = arith.constant 5.000000e-01 : f32
    %209 = vector.broadcast %cst_75 : f32 to vector<2x64xf32>
    %210 = arith.mulf %209, %173 : vector<2x64xf32>
    %cst_76 = arith.constant 1.000000e+00 : f32
    %211 = vector.broadcast %cst_76 : f32 to vector<2x64xf32>
    %212 = arith.addf %211, %208 : vector<2x64xf32>
    %213 = arith.mulf %210, %212 : vector<2x64xf32>
    %214 = arith.truncf %213 : vector<2x64xf32> to vector<2x64xbf16>
    %cst_77 = arith.constant dense<0.000000e+00> : vector<2x32xf32>
    %215 = tpu.matmul %214, %36, %cst_77 {dimension_numbers = #tpu.dot_dimension_numbers<[1], [0], [0], [1], [0, 0, 1, 1], [], []>} : vector<2x64xbf16>, vector<64x32xbf16>, vector<2x32xf32> -> vector<2x32xf32>
    %216 = vector.broadcast %28 : vector<1x32xf32> to vector<2x32xf32>
    %217 = arith.addf %215, %216 : vector<2x32xf32>
    %218 = arith.addf %169, %217 : vector<2x32xf32>
    %219 = vector.broadcast %31 : vector<1x32xf32> to vector<2x32xf32>
    %220 = arith.mulf %218, %219 : vector<2x32xf32>
    %221 = vector.broadcast %32 : vector<1x32xf32> to vector<2x32xf32>
    %222 = arith.addf %220, %221 : vector<2x32xf32>
    %c0_78 = arith.constant 0 : index
    %c0_79 = arith.constant 0 : index
    %c64 = arith.constant 64 : index
    %223 = vector.load %arg11[%c0_78, %c0_79, %c64] : memref<2x2x128xf32, #tpu.memory_space<vmem>>, vector<1x2x32xf32>
    %224 = vector.shape_cast %223 : vector<1x2x32xf32> to vector<2x32xf32>
    %225 = vector.shape_cast %222 : vector<2x32xf32> to vector<1x2x32xf32>
    tpu.vector_store %arg11[%c0_78, %c0_79, %c64], %225 {strides = array<i32>} : memref<2x2x128xf32, #tpu.memory_space<vmem>>, vector<1x2x32xf32>,
    %226 = vector.extract_strided_slice %4 {offsets = [0, 96], sizes = [2, 32], strides = [1, 1]} : vector<2x128xf32> to vector<2x32xf32>
    %227 = vector.extract_strided_slice %22 {offsets = [0, 96], sizes = [2, 32], strides = [1, 1]} : vector<2x128xf32> to vector<2x32xf32>
    %228 = arith.addf %226, %227 : vector<2x32xf32>
    %229 = vector.broadcast %29 : vector<1x32xf32> to vector<2x32xf32>
    %230 = arith.mulf %228, %229 : vector<2x32xf32>
    %231 = vector.broadcast %30 : vector<1x32xf32> to vector<2x32xf32>
    %232 = arith.addf %230, %231 : vector<2x32xf32>
    %233 = arith.truncf %232 : vector<2x32xf32> to vector<2x32xbf16>
    %cst_80 = arith.constant dense<0.000000e+00> : vector<2x64xf32>
    %234 = tpu.matmul %233, %34, %cst_80 {dimension_numbers = #tpu.dot_dimension_numbers<[1], [0], [0], [1], [0, 0, 1, 1], [], []>} : vector<2x32xbf16>, vector<32x64xbf16>, vector<2x64xf32> -> vector<2x64xf32>
    %235 = vector.broadcast %27 : vector<1x64xf32> to vector<2x64xf32>
    %236 = arith.addf %234, %235 : vector<2x64xf32>
    %cst_81 = arith.constant 0.707106769 : f32
    %237 = vector.broadcast %cst_81 : f32 to vector<2x64xf32>
    %238 = arith.mulf %236, %237 : vector<2x64xf32>
    %239 = math.absf %238 : vector<2x64xf32>
    %cst_82 = arith.constant 0.327591091 : f32
    %240 = vector.broadcast %cst_82 : f32 to vector<2x64xf32>
    %241 = arith.mulf %240, %239 : vector<2x64xf32>
    %cst_83 = arith.constant 1.000000e+00 : f32
    %242 = vector.broadcast %cst_83 : f32 to vector<2x64xf32>
    %243 = arith.addf %242, %241 : vector<2x64xf32>
    %cst_84 = arith.constant 1.000000e+00 : f32
    %244 = vector.broadcast %cst_84 : f32 to vector<2x64xf32>
    %245 = arith.divf %244, %243 : vector<2x64xf32>
    %cst_85 = arith.constant 1.06140542 : f32
    %246 = vector.broadcast %cst_85 : f32 to vector<2x64xf32>
    %247 = arith.mulf %245, %246 : vector<2x64xf32>
    %cst_86 = arith.constant -1.45315206 : f32
    %248 = vector.broadcast %cst_86 : f32 to vector<2x64xf32>
    %249 = arith.addf %248, %247 : vector<2x64xf32>
    %250 = arith.mulf %245, %249 : vector<2x64xf32>
    %cst_87 = arith.constant 1.42141378 : f32
    %251 = vector.broadcast %cst_87 : f32 to vector<2x64xf32>
    %252 = arith.addf %251, %250 : vector<2x64xf32>
    %253 = arith.mulf %245, %252 : vector<2x64xf32>
    %cst_88 = arith.constant -0.284496725 : f32
    %254 = vector.broadcast %cst_88 : f32 to vector<2x64xf32>
    %255 = arith.addf %254, %253 : vector<2x64xf32>
    %256 = arith.mulf %245, %255 : vector<2x64xf32>
    %cst_89 = arith.constant 0.254829586 : f32
    %257 = vector.broadcast %cst_89 : f32 to vector<2x64xf32>
    %258 = arith.addf %257, %256 : vector<2x64xf32>
    %259 = arith.mulf %245, %258 : vector<2x64xf32>
    %cst_90 = arith.constant 0.000000e+00 : f32
    %260 = vector.broadcast %cst_90 : f32 to vector<2x64xf32>
    %261 = arith.subf %260, %239 : vector<2x64xf32>
    %262 = arith.mulf %261, %239 : vector<2x64xf32>
    %263 = math.exp %262 : vector<2x64xf32>
    %264 = arith.mulf %259, %263 : vector<2x64xf32>
    %cst_91 = arith.constant 1.000000e+00 : f32
    %265 = vector.broadcast %cst_91 : f32 to vector<2x64xf32>
    %266 = arith.subf %265, %264 : vector<2x64xf32>
    %cst_92 = arith.constant 0.000000e+00 : f32
    %267 = vector.broadcast %cst_92 : f32 to vector<2x64xf32>
    %268 = arith.cmpf olt, %238, %267 : vector<2x64xf32>
    %cst_93 = arith.constant 0.000000e+00 : f32
    %269 = vector.broadcast %cst_93 : f32 to vector<2x64xf32>
    %270 = arith.subf %269, %266 : vector<2x64xf32>
    %271 = arith.select %268, %270, %266 : vector<2x64xi1>, vector<2x64xf32>
    %cst_94 = arith.constant 5.000000e-01 : f32
    %272 = vector.broadcast %cst_94 : f32 to vector<2x64xf32>
    %273 = arith.mulf %272, %236 : vector<2x64xf32>
    %cst_95 = arith.constant 1.000000e+00 : f32
    %274 = vector.broadcast %cst_95 : f32 to vector<2x64xf32>
    %275 = arith.addf %274, %271 : vector<2x64xf32>
    %276 = arith.mulf %273, %275 : vector<2x64xf32>
    %277 = arith.truncf %276 : vector<2x64xf32> to vector<2x64xbf16>
    %cst_96 = arith.constant dense<0.000000e+00> : vector<2x32xf32>
    %278 = tpu.matmul %277, %36, %cst_96 {dimension_numbers = #tpu.dot_dimension_numbers<[1], [0], [0], [1], [0, 0, 1, 1], [], []>} : vector<2x64xbf16>, vector<64x32xbf16>, vector<2x32xf32> -> vector<2x32xf32>
    %279 = vector.broadcast %28 : vector<1x32xf32> to vector<2x32xf32>
    %280 = arith.addf %278, %279 : vector<2x32xf32>
    %281 = arith.addf %232, %280 : vector<2x32xf32>
    %282 = vector.broadcast %31 : vector<1x32xf32> to vector<2x32xf32>
    %283 = arith.mulf %281, %282 : vector<2x32xf32>
    %284 = vector.broadcast %32 : vector<1x32xf32> to vector<2x32xf32>
    %285 = arith.addf %283, %284 : vector<2x32xf32>
    %c0_97 = arith.constant 0 : index
    %c0_98 = arith.constant 0 : index
    %c96 = arith.constant 96 : index
    %286 = vector.load %arg11[%c0_97, %c0_98, %c96] : memref<2x2x128xf32, #tpu.memory_space<vmem>>, vector<1x2x32xf32>
    %287 = vector.shape_cast %286 : vector<1x2x32xf32> to vector<2x32xf32>
    %288 = vector.shape_cast %285 : vector<2x32xf32> to vector<1x2x32xf32>
    tpu.vector_store %arg11[%c0_97, %c0_98, %c96], %288 {strides = array<i32>} : memref<2x2x128xf32, #tpu.memory_space<vmem>>, vector<1x2x32xf32>,
    %289 = vector.extract_strided_slice %6 {offsets = [0, 0], sizes = [2, 32], strides = [1, 1]} : vector<2x128xf32> to vector<2x32xf32>
    %290 = vector.extract_strided_slice %24 {offsets = [0, 0], sizes = [2, 32], strides = [1, 1]} : vector<2x128xf32> to vector<2x32xf32>
    %291 = arith.addf %289, %290 : vector<2x32xf32>
    %292 = vector.broadcast %29 : vector<1x32xf32> to vector<2x32xf32>
    %293 = arith.mulf %291, %292 : vector<2x32xf32>
    %294 = vector.broadcast %30 : vector<1x32xf32> to vector<2x32xf32>
    %295 = arith.addf %293, %294 : vector<2x32xf32>
    %296 = arith.truncf %295 : vector<2x32xf32> to vector<2x32xbf16>
    %cst_99 = arith.constant dense<0.000000e+00> : vector<2x64xf32>
    %297 = tpu.matmul %296, %34, %cst_99 {dimension_numbers = #tpu.dot_dimension_numbers<[1], [0], [0], [1], [0, 0, 1, 1], [], []>} : vector<2x32xbf16>, vector<32x64xbf16>, vector<2x64xf32> -> vector<2x64xf32>
    %298 = vector.broadcast %27 : vector<1x64xf32> to vector<2x64xf32>
    %299 = arith.addf %297, %298 : vector<2x64xf32>
    %cst_100 = arith.constant 0.707106769 : f32
    %300 = vector.broadcast %cst_100 : f32 to vector<2x64xf32>
    %301 = arith.mulf %299, %300 : vector<2x64xf32>
    %302 = math.absf %301 : vector<2x64xf32>
    %cst_101 = arith.constant 0.327591091 : f32
    %303 = vector.broadcast %cst_101 : f32 to vector<2x64xf32>
    %304 = arith.mulf %303, %302 : vector<2x64xf32>
    %cst_102 = arith.constant 1.000000e+00 : f32
    %305 = vector.broadcast %cst_102 : f32 to vector<2x64xf32>
    %306 = arith.addf %305, %304 : vector<2x64xf32>
    %cst_103 = arith.constant 1.000000e+00 : f32
    %307 = vector.broadcast %cst_103 : f32 to vector<2x64xf32>
    %308 = arith.divf %307, %306 : vector<2x64xf32>
    %cst_104 = arith.constant 1.06140542 : f32
    %309 = vector.broadcast %cst_104 : f32 to vector<2x64xf32>
    %310 = arith.mulf %308, %309 : vector<2x64xf32>
    %cst_105 = arith.constant -1.45315206 : f32
    %311 = vector.broadcast %cst_105 : f32 to vector<2x64xf32>
    %312 = arith.addf %311, %310 : vector<2x64xf32>
    %313 = arith.mulf %308, %312 : vector<2x64xf32>
    %cst_106 = arith.constant 1.42141378 : f32
    %314 = vector.broadcast %cst_106 : f32 to vector<2x64xf32>
    %315 = arith.addf %314, %313 : vector<2x64xf32>
    %316 = arith.mulf %308, %315 : vector<2x64xf32>
    %cst_107 = arith.constant -0.284496725 : f32
    %317 = vector.broadcast %cst_107 : f32 to vector<2x64xf32>
    %318 = arith.addf %317, %316 : vector<2x64xf32>
    %319 = arith.mulf %308, %318 : vector<2x64xf32>
    %cst_108 = arith.constant 0.254829586 : f32
    %320 = vector.broadcast %cst_108 : f32 to vector<2x64xf32>
    %321 = arith.addf %320, %319 : vector<2x64xf32>
    %322 = arith.mulf %308, %321 : vector<2x64xf32>
    %cst_109 = arith.constant 0.000000e+00 : f32
    %323 = vector.broadcast %cst_109 : f32 to vector<2x64xf32>
    %324 = arith.subf %323, %302 : vector<2x64xf32>
    %325 = arith.mulf %324, %302 : vector<2x64xf32>
    %326 = math.exp %325 : vector<2x64xf32>
    %327 = arith.mulf %322, %326 : vector<2x64xf32>
    %cst_110 = arith.constant 1.000000e+00 : f32
    %328 = vector.broadcast %cst_110 : f32 to vector<2x64xf32>
    %329 = arith.subf %328, %327 : vector<2x64xf32>
    %cst_111 = arith.constant 0.000000e+00 : f32
    %330 = vector.broadcast %cst_111 : f32 to vector<2x64xf32>
    %331 = arith.cmpf olt, %301, %330 : vector<2x64xf32>
    %cst_112 = arith.constant 0.000000e+00 : f32
    %332 = vector.broadcast %cst_112 : f32 to vector<2x64xf32>
    %333 = arith.subf %332, %329 : vector<2x64xf32>
    %334 = arith.select %331, %333, %329 : vector<2x64xi1>, vector<2x64xf32>
    %cst_113 = arith.constant 5.000000e-01 : f32
    %335 = vector.broadcast %cst_113 : f32 to vector<2x64xf32>
    %336 = arith.mulf %335, %299 : vector<2x64xf32>
    %cst_114 = arith.constant 1.000000e+00 : f32
    %337 = vector.broadcast %cst_114 : f32 to vector<2x64xf32>
    %338 = arith.addf %337, %334 : vector<2x64xf32>
    %339 = arith.mulf %336, %338 : vector<2x64xf32>
    %340 = arith.truncf %339 : vector<2x64xf32> to vector<2x64xbf16>
    %cst_115 = arith.constant dense<0.000000e+00> : vector<2x32xf32>
    %341 = tpu.matmul %340, %36, %cst_115 {dimension_numbers = #tpu.dot_dimension_numbers<[1], [0], [0], [1], [0, 0, 1, 1], [], []>} : vector<2x64xbf16>, vector<64x32xbf16>, vector<2x32xf32> -> vector<2x32xf32>
    %342 = vector.broadcast %28 : vector<1x32xf32> to vector<2x32xf32>
    %343 = arith.addf %341, %342 : vector<2x32xf32>
    %344 = arith.addf %295, %343 : vector<2x32xf32>
    %345 = vector.broadcast %31 : vector<1x32xf32> to vector<2x32xf32>
    %346 = arith.mulf %344, %345 : vector<2x32xf32>
    %347 = vector.broadcast %32 : vector<1x32xf32> to vector<2x32xf32>
    %348 = arith.addf %346, %347 : vector<2x32xf32>
    %c1_116 = arith.constant 1 : index
    %c0_117 = arith.constant 0 : index
    %c0_118 = arith.constant 0 : index
    %349 = vector.load %arg11[%c1_116, %c0_117, %c0_118] : memref<2x2x128xf32, #tpu.memory_space<vmem>>, vector<1x2x32xf32>
    %350 = vector.shape_cast %349 : vector<1x2x32xf32> to vector<2x32xf32>
    %351 = vector.shape_cast %348 : vector<2x32xf32> to vector<1x2x32xf32>
    tpu.vector_store %arg11[%c1_116, %c0_117, %c0_118], %351 {strides = array<i32>} : memref<2x2x128xf32, #tpu.memory_space<vmem>>, vector<1x2x32xf32>,
    %352 = vector.extract_strided_slice %6 {offsets = [0, 32], sizes = [2, 32], strides = [1, 1]} : vector<2x128xf32> to vector<2x32xf32>
    %353 = vector.extract_strided_slice %24 {offsets = [0, 32], sizes = [2, 32], strides = [1, 1]} : vector<2x128xf32> to vector<2x32xf32>
    %354 = arith.addf %352, %353 : vector<2x32xf32>
    %355 = vector.broadcast %29 : vector<1x32xf32> to vector<2x32xf32>
    %356 = arith.mulf %354, %355 : vector<2x32xf32>
    %357 = vector.broadcast %30 : vector<1x32xf32> to vector<2x32xf32>
    %358 = arith.addf %356, %357 : vector<2x32xf32>
    %359 = arith.truncf %358 : vector<2x32xf32> to vector<2x32xbf16>
    %cst_119 = arith.constant dense<0.000000e+00> : vector<2x64xf32>
    %360 = tpu.matmul %359, %34, %cst_119 {dimension_numbers = #tpu.dot_dimension_numbers<[1], [0], [0], [1], [0, 0, 1, 1], [], []>} : vector<2x32xbf16>, vector<32x64xbf16>, vector<2x64xf32> -> vector<2x64xf32>
    %361 = vector.broadcast %27 : vector<1x64xf32> to vector<2x64xf32>
    %362 = arith.addf %360, %361 : vector<2x64xf32>
    %cst_120 = arith.constant 0.707106769 : f32
    %363 = vector.broadcast %cst_120 : f32 to vector<2x64xf32>
    %364 = arith.mulf %362, %363 : vector<2x64xf32>
    %365 = math.absf %364 : vector<2x64xf32>
    %cst_121 = arith.constant 0.327591091 : f32
    %366 = vector.broadcast %cst_121 : f32 to vector<2x64xf32>
    %367 = arith.mulf %366, %365 : vector<2x64xf32>
    %cst_122 = arith.constant 1.000000e+00 : f32
    %368 = vector.broadcast %cst_122 : f32 to vector<2x64xf32>
    %369 = arith.addf %368, %367 : vector<2x64xf32>
    %cst_123 = arith.constant 1.000000e+00 : f32
    %370 = vector.broadcast %cst_123 : f32 to vector<2x64xf32>
    %371 = arith.divf %370, %369 : vector<2x64xf32>
    %cst_124 = arith.constant 1.06140542 : f32
    %372 = vector.broadcast %cst_124 : f32 to vector<2x64xf32>
    %373 = arith.mulf %371, %372 : vector<2x64xf32>
    %cst_125 = arith.constant -1.45315206 : f32
    %374 = vector.broadcast %cst_125 : f32 to vector<2x64xf32>
    %375 = arith.addf %374, %373 : vector<2x64xf32>
    %376 = arith.mulf %371, %375 : vector<2x64xf32>
    %cst_126 = arith.constant 1.42141378 : f32
    %377 = vector.broadcast %cst_126 : f32 to vector<2x64xf32>
    %378 = arith.addf %377, %376 : vector<2x64xf32>
    %379 = arith.mulf %371, %378 : vector<2x64xf32>
    %cst_127 = arith.constant -0.284496725 : f32
    %380 = vector.broadcast %cst_127 : f32 to vector<2x64xf32>
    %381 = arith.addf %380, %379 : vector<2x64xf32>
    %382 = arith.mulf %371, %381 : vector<2x64xf32>
    %cst_128 = arith.constant 0.254829586 : f32
    %383 = vector.broadcast %cst_128 : f32 to vector<2x64xf32>
    %384 = arith.addf %383, %382 : vector<2x64xf32>
    %385 = arith.mulf %371, %384 : vector<2x64xf32>
    %cst_129 = arith.constant 0.000000e+00 : f32
    %386 = vector.broadcast %cst_129 : f32 to vector<2x64xf32>
    %387 = arith.subf %386, %365 : vector<2x64xf32>
    %388 = arith.mulf %387, %365 : vector<2x64xf32>
    %389 = math.exp %388 : vector<2x64xf32>
    %390 = arith.mulf %385, %389 : vector<2x64xf32>
    %cst_130 = arith.constant 1.000000e+00 : f32
    %391 = vector.broadcast %cst_130 : f32 to vector<2x64xf32>
    %392 = arith.subf %391, %390 : vector<2x64xf32>
    %cst_131 = arith.constant 0.000000e+00 : f32
    %393 = vector.broadcast %cst_131 : f32 to vector<2x64xf32>
    %394 = arith.cmpf olt, %364, %393 : vector<2x64xf32>
    %cst_132 = arith.constant 0.000000e+00 : f32
    %395 = vector.broadcast %cst_132 : f32 to vector<2x64xf32>
    %396 = arith.subf %395, %392 : vector<2x64xf32>
    %397 = arith.select %394, %396, %392 : vector<2x64xi1>, vector<2x64xf32>
    %cst_133 = arith.constant 5.000000e-01 : f32
    %398 = vector.broadcast %cst_133 : f32 to vector<2x64xf32>
    %399 = arith.mulf %398, %362 : vector<2x64xf32>
    %cst_134 = arith.constant 1.000000e+00 : f32
    %400 = vector.broadcast %cst_134 : f32 to vector<2x64xf32>
    %401 = arith.addf %400, %397 : vector<2x64xf32>
    %402 = arith.mulf %399, %401 : vector<2x64xf32>
    %403 = arith.truncf %402 : vector<2x64xf32> to vector<2x64xbf16>
    %cst_135 = arith.constant dense<0.000000e+00> : vector<2x32xf32>
    %404 = tpu.matmul %403, %36, %cst_135 {dimension_numbers = #tpu.dot_dimension_numbers<[1], [0], [0], [1], [0, 0, 1, 1], [], []>} : vector<2x64xbf16>, vector<64x32xbf16>, vector<2x32xf32> -> vector<2x32xf32>
    %405 = vector.broadcast %28 : vector<1x32xf32> to vector<2x32xf32>
    %406 = arith.addf %404, %405 : vector<2x32xf32>
    %407 = arith.addf %358, %406 : vector<2x32xf32>
    %408 = vector.broadcast %31 : vector<1x32xf32> to vector<2x32xf32>
    %409 = arith.mulf %407, %408 : vector<2x32xf32>
    %410 = vector.broadcast %32 : vector<1x32xf32> to vector<2x32xf32>
    %411 = arith.addf %409, %410 : vector<2x32xf32>
    %c1_136 = arith.constant 1 : index
    %c0_137 = arith.constant 0 : index
    %c32_138 = arith.constant 32 : index
    %412 = vector.load %arg11[%c1_136, %c0_137, %c32_138] : memref<2x2x128xf32, #tpu.memory_space<vmem>>, vector<1x2x32xf32>
    %413 = vector.shape_cast %412 : vector<1x2x32xf32> to vector<2x32xf32>
    %414 = vector.shape_cast %411 : vector<2x32xf32> to vector<1x2x32xf32>
    tpu.vector_store %arg11[%c1_136, %c0_137, %c32_138], %414 {strides = array<i32>} : memref<2x2x128xf32, #tpu.memory_space<vmem>>, vector<1x2x32xf32>,
    %415 = vector.extract_strided_slice %6 {offsets = [0, 64], sizes = [2, 32], strides = [1, 1]} : vector<2x128xf32> to vector<2x32xf32>
    %416 = vector.extract_strided_slice %24 {offsets = [0, 64], sizes = [2, 32], strides = [1, 1]} : vector<2x128xf32> to vector<2x32xf32>
    %417 = arith.addf %415, %416 : vector<2x32xf32>
    %418 = vector.broadcast %29 : vector<1x32xf32> to vector<2x32xf32>
    %419 = arith.mulf %417, %418 : vector<2x32xf32>
    %420 = vector.broadcast %30 : vector<1x32xf32> to vector<2x32xf32>
    %421 = arith.addf %419, %420 : vector<2x32xf32>
    %422 = arith.truncf %421 : vector<2x32xf32> to vector<2x32xbf16>
    %cst_139 = arith.constant dense<0.000000e+00> : vector<2x64xf32>
    %423 = tpu.matmul %422, %34, %cst_139 {dimension_numbers = #tpu.dot_dimension_numbers<[1], [0], [0], [1], [0, 0, 1, 1], [], []>} : vector<2x32xbf16>, vector<32x64xbf16>, vector<2x64xf32> -> vector<2x64xf32>
    %424 = vector.broadcast %27 : vector<1x64xf32> to vector<2x64xf32>
    %425 = arith.addf %423, %424 : vector<2x64xf32>
    %cst_140 = arith.constant 0.707106769 : f32
    %426 = vector.broadcast %cst_140 : f32 to vector<2x64xf32>
    %427 = arith.mulf %425, %426 : vector<2x64xf32>
    %428 = math.absf %427 : vector<2x64xf32>
    %cst_141 = arith.constant 0.327591091 : f32
    %429 = vector.broadcast %cst_141 : f32 to vector<2x64xf32>
    %430 = arith.mulf %429, %428 : vector<2x64xf32>
    %cst_142 = arith.constant 1.000000e+00 : f32
    %431 = vector.broadcast %cst_142 : f32 to vector<2x64xf32>
    %432 = arith.addf %431, %430 : vector<2x64xf32>
    %cst_143 = arith.constant 1.000000e+00 : f32
    %433 = vector.broadcast %cst_143 : f32 to vector<2x64xf32>
    %434 = arith.divf %433, %432 : vector<2x64xf32>
    %cst_144 = arith.constant 1.06140542 : f32
    %435 = vector.broadcast %cst_144 : f32 to vector<2x64xf32>
    %436 = arith.mulf %434, %435 : vector<2x64xf32>
    %cst_145 = arith.constant -1.45315206 : f32
    %437 = vector.broadcast %cst_145 : f32 to vector<2x64xf32>
    %438 = arith.addf %437, %436 : vector<2x64xf32>
    %439 = arith.mulf %434, %438 : vector<2x64xf32>
    %cst_146 = arith.constant 1.42141378 : f32
    %440 = vector.broadcast %cst_146 : f32 to vector<2x64xf32>
    %441 = arith.addf %440, %439 : vector<2x64xf32>
    %442 = arith.mulf %434, %441 : vector<2x64xf32>
    %cst_147 = arith.constant -0.284496725 : f32
    %443 = vector.broadcast %cst_147 : f32 to vector<2x64xf32>
    %444 = arith.addf %443, %442 : vector<2x64xf32>
    %445 = arith.mulf %434, %444 : vector<2x64xf32>
    %cst_148 = arith.constant 0.254829586 : f32
    %446 = vector.broadcast %cst_148 : f32 to vector<2x64xf32>
    %447 = arith.addf %446, %445 : vector<2x64xf32>
    %448 = arith.mulf %434, %447 : vector<2x64xf32>
    %cst_149 = arith.constant 0.000000e+00 : f32
    %449 = vector.broadcast %cst_149 : f32 to vector<2x64xf32>
    %450 = arith.subf %449, %428 : vector<2x64xf32>
    %451 = arith.mulf %450, %428 : vector<2x64xf32>
    %452 = math.exp %451 : vector<2x64xf32>
    %453 = arith.mulf %448, %452 : vector<2x64xf32>
    %cst_150 = arith.constant 1.000000e+00 : f32
    %454 = vector.broadcast %cst_150 : f32 to vector<2x64xf32>
    %455 = arith.subf %454, %453 : vector<2x64xf32>
    %cst_151 = arith.constant 0.000000e+00 : f32
    %456 = vector.broadcast %cst_151 : f32 to vector<2x64xf32>
    %457 = arith.cmpf olt, %427, %456 : vector<2x64xf32>
    %cst_152 = arith.constant 0.000000e+00 : f32
    %458 = vector.broadcast %cst_152 : f32 to vector<2x64xf32>
    %459 = arith.subf %458, %455 : vector<2x64xf32>
    %460 = arith.select %457, %459, %455 : vector<2x64xi1>, vector<2x64xf32>
    %cst_153 = arith.constant 5.000000e-01 : f32
    %461 = vector.broadcast %cst_153 : f32 to vector<2x64xf32>
    %462 = arith.mulf %461, %425 : vector<2x64xf32>
    %cst_154 = arith.constant 1.000000e+00 : f32
    %463 = vector.broadcast %cst_154 : f32 to vector<2x64xf32>
    %464 = arith.addf %463, %460 : vector<2x64xf32>
    %465 = arith.mulf %462, %464 : vector<2x64xf32>
    %466 = arith.truncf %465 : vector<2x64xf32> to vector<2x64xbf16>
    %cst_155 = arith.constant dense<0.000000e+00> : vector<2x32xf32>
    %467 = tpu.matmul %466, %36, %cst_155 {dimension_numbers = #tpu.dot_dimension_numbers<[1], [0], [0], [1], [0, 0, 1, 1], [], []>} : vector<2x64xbf16>, vector<64x32xbf16>, vector<2x32xf32> -> vector<2x32xf32>
    %468 = vector.broadcast %28 : vector<1x32xf32> to vector<2x32xf32>
    %469 = arith.addf %467, %468 : vector<2x32xf32>
    %470 = arith.addf %421, %469 : vector<2x32xf32>
    %471 = vector.broadcast %31 : vector<1x32xf32> to vector<2x32xf32>
    %472 = arith.mulf %470, %471 : vector<2x32xf32>
    %473 = vector.broadcast %32 : vector<1x32xf32> to vector<2x32xf32>
    %474 = arith.addf %472, %473 : vector<2x32xf32>
    %c1_156 = arith.constant 1 : index
    %c0_157 = arith.constant 0 : index
    %c64_158 = arith.constant 64 : index
    %475 = vector.load %arg11[%c1_156, %c0_157, %c64_158] : memref<2x2x128xf32, #tpu.memory_space<vmem>>, vector<1x2x32xf32>
    %476 = vector.shape_cast %475 : vector<1x2x32xf32> to vector<2x32xf32>
    %477 = vector.shape_cast %474 : vector<2x32xf32> to vector<1x2x32xf32>
    tpu.vector_store %arg11[%c1_156, %c0_157, %c64_158], %477 {strides = array<i32>} : memref<2x2x128xf32, #tpu.memory_space<vmem>>, vector<1x2x32xf32>,
    %478 = vector.extract_strided_slice %6 {offsets = [0, 96], sizes = [2, 32], strides = [1, 1]} : vector<2x128xf32> to vector<2x32xf32>
    %479 = vector.extract_strided_slice %24 {offsets = [0, 96], sizes = [2, 32], strides = [1, 1]} : vector<2x128xf32> to vector<2x32xf32>
    %480 = arith.addf %478, %479 : vector<2x32xf32>
    %481 = vector.broadcast %29 : vector<1x32xf32> to vector<2x32xf32>
    %482 = arith.mulf %480, %481 : vector<2x32xf32>
    %483 = vector.broadcast %30 : vector<1x32xf32> to vector<2x32xf32>
    %484 = arith.addf %482, %483 : vector<2x32xf32>
    %485 = arith.truncf %484 : vector<2x32xf32> to vector<2x32xbf16>
    %cst_159 = arith.constant dense<0.000000e+00> : vector<2x64xf32>
    %486 = tpu.matmul %485, %34, %cst_159 {dimension_numbers = #tpu.dot_dimension_numbers<[1], [0], [0], [1], [0, 0, 1, 1], [], []>} : vector<2x32xbf16>, vector<32x64xbf16>, vector<2x64xf32> -> vector<2x64xf32>
    %487 = vector.broadcast %27 : vector<1x64xf32> to vector<2x64xf32>
    %488 = arith.addf %486, %487 : vector<2x64xf32>
    %cst_160 = arith.constant 0.707106769 : f32
    %489 = vector.broadcast %cst_160 : f32 to vector<2x64xf32>
    %490 = arith.mulf %488, %489 : vector<2x64xf32>
    %491 = math.absf %490 : vector<2x64xf32>
    %cst_161 = arith.constant 0.327591091 : f32
    %492 = vector.broadcast %cst_161 : f32 to vector<2x64xf32>
    %493 = arith.mulf %492, %491 : vector<2x64xf32>
    %cst_162 = arith.constant 1.000000e+00 : f32
    %494 = vector.broadcast %cst_162 : f32 to vector<2x64xf32>
    %495 = arith.addf %494, %493 : vector<2x64xf32>
    %cst_163 = arith.constant 1.000000e+00 : f32
    %496 = vector.broadcast %cst_163 : f32 to vector<2x64xf32>
    %497 = arith.divf %496, %495 : vector<2x64xf32>
    %cst_164 = arith.constant 1.06140542 : f32
    %498 = vector.broadcast %cst_164 : f32 to vector<2x64xf32>
    %499 = arith.mulf %497, %498 : vector<2x64xf32>
    %cst_165 = arith.constant -1.45315206 : f32
    %500 = vector.broadcast %cst_165 : f32 to vector<2x64xf32>
    %501 = arith.addf %500, %499 : vector<2x64xf32>
    %502 = arith.mulf %497, %501 : vector<2x64xf32>
    %cst_166 = arith.constant 1.42141378 : f32
    %503 = vector.broadcast %cst_166 : f32 to vector<2x64xf32>
    %504 = arith.addf %503, %502 : vector<2x64xf32>
    %505 = arith.mulf %497, %504 : vector<2x64xf32>
    %cst_167 = arith.constant -0.284496725 : f32
    %506 = vector.broadcast %cst_167 : f32 to vector<2x64xf32>
    %507 = arith.addf %506, %505 : vector<2x64xf32>
    %508 = arith.mulf %497, %507 : vector<2x64xf32>
    %cst_168 = arith.constant 0.254829586 : f32
    %509 = vector.broadcast %cst_168 : f32 to vector<2x64xf32>
    %510 = arith.addf %509, %508 : vector<2x64xf32>
    %511 = arith.mulf %497, %510 : vector<2x64xf32>
    %cst_169 = arith.constant 0.000000e+00 : f32
    %512 = vector.broadcast %cst_169 : f32 to vector<2x64xf32>
    %513 = arith.subf %512, %491 : vector<2x64xf32>
    %514 = arith.mulf %513, %491 : vector<2x64xf32>
    %515 = math.exp %514 : vector<2x64xf32>
    %516 = arith.mulf %511, %515 : vector<2x64xf32>
    %cst_170 = arith.constant 1.000000e+00 : f32
    %517 = vector.broadcast %cst_170 : f32 to vector<2x64xf32>
    %518 = arith.subf %517, %516 : vector<2x64xf32>
    %cst_171 = arith.constant 0.000000e+00 : f32
    %519 = vector.broadcast %cst_171 : f32 to vector<2x64xf32>
    %520 = arith.cmpf olt, %490, %519 : vector<2x64xf32>
    %cst_172 = arith.constant 0.000000e+00 : f32
    %521 = vector.broadcast %cst_172 : f32 to vector<2x64xf32>
    %522 = arith.subf %521, %518 : vector<2x64xf32>
    %523 = arith.select %520, %522, %518 : vector<2x64xi1>, vector<2x64xf32>
    %cst_173 = arith.constant 5.000000e-01 : f32
    %524 = vector.broadcast %cst_173 : f32 to vector<2x64xf32>
    %525 = arith.mulf %524, %488 : vector<2x64xf32>
    %cst_174 = arith.constant 1.000000e+00 : f32
    %526 = vector.broadcast %cst_174 : f32 to vector<2x64xf32>
    %527 = arith.addf %526, %523 : vector<2x64xf32>
    %528 = arith.mulf %525, %527 : vector<2x64xf32>
    %529 = arith.truncf %528 : vector<2x64xf32> to vector<2x64xbf16>
    %cst_175 = arith.constant dense<0.000000e+00> : vector<2x32xf32>
    %530 = tpu.matmul %529, %36, %cst_175 {dimension_numbers = #tpu.dot_dimension_numbers<[1], [0], [0], [1], [0, 0, 1, 1], [], []>} : vector<2x64xbf16>, vector<64x32xbf16>, vector<2x32xf32> -> vector<2x32xf32>
    %531 = vector.broadcast %28 : vector<1x32xf32> to vector<2x32xf32>
    %532 = arith.addf %530, %531 : vector<2x32xf32>
    %533 = arith.addf %484, %532 : vector<2x32xf32>
    %534 = vector.broadcast %31 : vector<1x32xf32> to vector<2x32xf32>
    %535 = arith.mulf %533, %534 : vector<2x32xf32>
    %536 = vector.broadcast %32 : vector<1x32xf32> to vector<2x32xf32>
    %537 = arith.addf %535, %536 : vector<2x32xf32>
    %c1_176 = arith.constant 1 : index
    %c0_177 = arith.constant 0 : index
    %c96_178 = arith.constant 96 : index
    %538 = vector.load %arg11[%c1_176, %c0_177, %c96_178] : memref<2x2x128xf32, #tpu.memory_space<vmem>>, vector<1x2x32xf32>
    %539 = vector.shape_cast %538 : vector<1x2x32xf32> to vector<2x32xf32>
    %540 = vector.shape_cast %537 : vector<2x32xf32> to vector<1x2x32xf32>
    tpu.vector_store %arg11[%c1_176, %c0_177, %c96_178], %540 {strides = array<i32>} : memref<2x2x128xf32, #tpu.memory_space<vmem>>, vector<1x2x32xf32>,
    %c2_i32 = arith.constant 2 : i32
    %541 = arith.cmpi eq, %arg1, %c2_i32 : i32
    %542 = arith.extui %541 : i1 to i32
    %c0_i32_179 = arith.constant 0 : i32
    %543 = arith.cmpi ne, %542, %c0_i32_179 : i32
    scf.if %543 {
      %c0_180 = arith.constant 0 : index
      %c0_181 = arith.constant 0 : index
      %c0_182 = arith.constant 0 : index
      %544 = vector.load %arg11[%c0_180, %c0_181, %c0_182] : memref<2x2x128xf32, #tpu.memory_space<vmem>>, vector<1x2x128xf32>
      %545 = vector.shape_cast %544 : vector<1x2x128xf32> to vector<2x128xf32>
      %c0_183 = arith.constant 0 : index
      %c0_184 = arith.constant 0 : index
      %c0_185 = arith.constant 0 : index
      %546 = vector.load %arg10[%c0_183, %c0_184, %c0_185] : memref<2x2x128xf32, #tpu.memory_space<vmem>>, vector<1x2x128xf32>
      %547 = vector.shape_cast %546 : vector<1x2x128xf32> to vector<2x128xf32>
      %548 = vector.shape_cast %545 : vector<2x128xf32> to vector<1x2x128xf32>
      tpu.vector_store %arg10[%c0_183, %c0_184, %c0_185], %548 {strides = array<i32>} : memref<2x2x128xf32, #tpu.memory_space<vmem>>, vector<1x2x128xf32>,
      %c1_186 = arith.constant 1 : index
      %c0_187 = arith.constant 0 : index
      %c0_188 = arith.constant 0 : index
      %549 = vector.load %arg11[%c1_186, %c0_187, %c0_188] : memref<2x2x128xf32, #tpu.memory_space<vmem>>, vector<1x2x128xf32>
      %550 = vector.shape_cast %549 : vector<1x2x128xf32> to vector<2x128xf32>
      %c1_189 = arith.constant 1 : index
      %c0_190 = arith.constant 0 : index
      %c0_191 = arith.constant 0 : index
      %551 = vector.load %arg10[%c1_189, %c0_190, %c0_191] : memref<2x2x128xf32, #tpu.memory_space<vmem>>, vector<1x2x128xf32>
      %552 = vector.shape_cast %551 : vector<1x2x128xf32> to vector<2x128xf32>
      %553 = vector.shape_cast %550 : vector<2x128xf32> to vector<1x2x128xf32>
      tpu.vector_store %arg10[%c1_189, %c0_190, %c0_191], %553 {strides = array<i32>} : memref<2x2x128xf32, #tpu.memory_space<vmem>>, vector<1x2x128xf32>,
    } else {
    }
    return
  }
  func.func @transform_0(%arg0: i32, %arg1: i32) -> (i32, i32, i32) {
    %c0_i32 = arith.constant 0 : i32
    %c0_i32_0 = arith.constant 0 : i32
    %c0_i32_1 = arith.constant 0 : i32
    return %c0_i32, %arg0, %c0_i32_0 : i32, i32, i32
  }
  func.func @transform_1(%arg0: i32, %arg1: i32) -> (i32, i32) {
    %c0_i32 = arith.constant 0 : i32
    %c0_i32_0 = arith.constant 0 : i32
    %c0_i32_1 = arith.constant 0 : i32
    return %c0_i32, %c0_i32_0 : i32, i32
  }
  func.func @transform_2(%arg0: i32, %arg1: i32) -> (i32, i32) {
    %c0_i32 = arith.constant 0 : i32
    %c0_i32_0 = arith.constant 0 : i32
    %c0_i32_1 = arith.constant 0 : i32
    return %c0_i32, %c0_i32_0 : i32, i32
  }
  func.func @transform_3(%arg0: i32, %arg1: i32) -> (i32, i32) {
    %c0_i32 = arith.constant 0 : i32
    %c0_i32_0 = arith.constant 0 : i32
    %c0_i32_1 = arith.constant 0 : i32
    return %c0_i32, %c0_i32_0 : i32, i32
  }
  func.func @transform_4(%arg0: i32, %arg1: i32) -> (i32, i32) {
    %c0_i32 = arith.constant 0 : i32
    %c0_i32_0 = arith.constant 0 : i32
    %c0_i32_1 = arith.constant 0 : i32
    return %c0_i32, %c0_i32_0 : i32, i32
  }
  func.func @transform_5(%arg0: i32, %arg1: i32) -> (i32, i32, i32) {
    %c0_i32 = arith.constant 0 : i32
    %c0_i32_0 = arith.constant 0 : i32
    %c0_i32_1 = arith.constant 0 : i32
    return %arg1, %c0_i32, %c0_i32_0 : i32, i32, i32
  }
  func.func @transform_6(%arg0: i32, %arg1: i32) -> (i32, i32, i32) {
    %c0_i32 = arith.constant 0 : i32
    %c0_i32_0 = arith.constant 0 : i32
    %c0_i32_1 = arith.constant 0 : i32
    return %arg1, %c0_i32, %c0_i32_0 : i32, i32, i32
  }
  func.func @transform_7(%arg0: i32, %arg1: i32) -> (i32, i32, i32) {
    %c0_i32 = arith.constant 0 : i32
    %c0_i32_0 = arith.constant 0 : i32
    %c0_i32_1 = arith.constant 0 : i32
    return %arg1, %c0_i32, %c0_i32_0 : i32, i32, i32
  }
  func.func @transform_8(%arg0: i32, %arg1: i32) -> (i32, i32, i32) {
    %c0_i32 = arith.constant 0 : i32
    %c0_i32_0 = arith.constant 0 : i32
    %c0_i32_1 = arith.constant 0 : i32
    return %c0_i32, %arg0, %c0_i32_0 : i32, i32, i32
  }
}

</mosaic_0001>

<llo_original>
// kernel: custom-call.1
$region0: #{custom-call.1}
  %s0 = inlined_call_operand.hbm [shape: c64[2,4,9], index: 0, kind: input, shape index: {}]
  %s1 = inlined_call_operand.vmem [shape: f32[2,4,9], index: 1, kind: output, shape index: {}]
  %s2 = scalar_lea.hbm %s0, 8
  $region1: #{custom-call.1} parent=0
    #allocation0 [shape = 's32[1]{0}', space=sflag, size = 0x4, scoped, tag = 'scoped memory for custom-call.1']
    %3 = vsyncpa [#allocation0], 0
    %s5 = sshll.u32 %s2, 4
    %s6 = int_to_ptr.hbm [resolvable:$true] %s5
    %s7 = sshll.u32 %s1, 4
    %s8 = int_to_ptr.vmem [resolvable:$true] %s7
    %10 = dma.hbm_to_vmem [thread:$0]  %s6, 128, %s8, [#allocation0]
    %12 = dma.done [#allocation0], 128
    %13 = vsyncpa [#allocation0], 1

// kernel: custom-call
$region0: #{custom-call}
  %s0 = inlined_call_operand.hbm [shape: c64[2,4,9], index: 0, kind: input, shape index: {}]
  %s1 = inlined_call_operand.vmem [shape: f32[2,4,9], index: 1, kind: output, shape index: {}]
  $region1: #{custom-call} parent=0
    #allocation0 [shape = 's32[1]{0}', space=sflag, size = 0x4, scoped, tag = 'scoped memory for custom-call']
    %2 = vsyncpa [#allocation0], 0
    %s4 = sshll.u32 %s0, 4
    %s5 = int_to_ptr.hbm [resolvable:$true] %s4
    %s6 = sshll.u32 %s1, 4
    %s7 = int_to_ptr.vmem [resolvable:$true] %s6
    %9 = dma.hbm_to_vmem [thread:$0]  %s5, 128, %s7, [#allocation0]
    %11 = dma.done [#allocation0], 128
    %12 = vsyncpa [#allocation0], 1

// kernel: squeeze.3
$region0: #{squeeze.3}
  %s0 = inlined_call_operand.vmem [shape: f32[1,2,128], index: 0, kind: input, shape index: {}]
  %s1 = inlined_call_operand.vmem [shape: f32[2,4,32], index: 1, kind: output, shape index: {}]
  $region1: #{squeeze.3} parent=0
    #allocation0 [shape = 'u8[8192]{0}', space=vmem, size = 0x2000, scoped, tag = 'scoped mem for output reshape']
    #allocation1 [shape = 'u8[4096]{0}', space=vmem, size = 0x1000, scoped, tag = 'scoped mem for input reshape']
    %s3 = ssub.s32 4, 1
    %v4 = vld [vmem:[%s0] sm:%s3]
    %5 = vst [vmem:[#allocation1] sm:%s3] %v4
    %v6 = vld [vmem:[#allocation1] sm:$0x3]
    %vm7 = vcmask 261120
    %8 = vst.msk [vmem:[#allocation0] ss:$8 sm:$0x3] %vm7, %v6
    %v9 = vld [vmem:[#allocation1] sm:$0x3]
    %10 = vrot.lane.b32.xlu0 %v9, 96
    %v11 = vpop.permute.xlu0 %10
    %vm12 = vcmask 261120
    %s13 = scalar_lea.vmem [#allocation0], 1
    %14 = vst.msk [vmem:[%s13] ss:$8 sm:$0x3] %vm12, %v11
    %v15 = vld [vmem:[#allocation1] sm:$0x3]
    %16 = vrot.lane.b32.xlu0 %v15, 64
    %v17 = vpop.permute.xlu0 %16
    %vm18 = vcmask 261120
    %s19 = scalar_lea.vmem [#allocation0], 2
    %20 = vst.msk [vmem:[%s19] ss:$8 sm:$0x3] %vm18, %v17
    %v21 = vld [vmem:[#allocation1] sm:$0x3]
    %22 = vrot.lane.b32.xlu0 %v21, 32
    %v23 = vpop.permute.xlu0 %22
    %vm24 = vcmask 261120
    %s25 = scalar_lea.vmem [#allocation0], 3
    %26 = vst.msk [vmem:[%s25] ss:$8 sm:$0x3] %vm24, %v23
    %s28 = ssub.s32 16, 1
    %v29 = vld [vmem:[#allocation0] sm:%s28]
    %s31 = ssub.s32 16, 1
    %32 = vst [vmem:[%s1] sm:%s31] %v29
    %s33 = scalar_lea.vmem [#allocation0], 8
    %v34 = vld [vmem:[%s33] sm:%s28]
    %s36 = ssub.s32 16, 1
    %s37 = scalar_lea.vmem %s1, 4
    %38 = vst [vmem:[%s37] sm:%s36] %v34

// kernel: custom-call.2
$region0: #{custom-call.2}
  %s0 = inlined_call_operand.vmem [shape: f32[2,4,32], index: 0, kind: input, shape index: {}]
  %s1 = inlined_call_operand.vmem [shape: f32[2,4,32], index: 1, kind: input, shape index: {}]
  %s2 = inlined_call_operand.hbm [shape: c64[2,4,32], index: 2, kind: output, shape index: {}]
  %s3 = scalar_lea.hbm %s2, 8
  $region1: #{custom-call.2} parent=0
    #allocation0 [shape = 's32[1]{0}', space=sflag, size = 0x4, scoped, tag = 'scoped memory for custom-call.2']
    %4 = vsyncpa [#allocation0], 0
    %s6 = sshll.u32 %s0, 4
    %s7 = int_to_ptr.vmem [resolvable:$true] %s6
    %s8 = sshll.u32 %s2, 4
    %s9 = int_to_ptr.hbm [resolvable:$true] %s8
    %11 = dma.vmem_to_hbm [thread:$0]  %s7, 128, %s9, [#allocation0]
    %13 = dma.done [#allocation0], 128
    %14 = vsyncpa [#allocation0], 1
  $region2: #{custom-call.2} parent=0
    #allocation1 [shape = 's32[1]{0}', space=sflag, size = 0x4, scoped, tag = 'scoped memory for custom-call.2']
    %15 = vsyncpa [#allocation1], 0
    %s17 = sshll.u32 %s1, 4
    %s18 = int_to_ptr.vmem [resolvable:$true] %s17
    %s19 = sshll.u32 %s3, 4
    %s20 = int_to_ptr.hbm [resolvable:$true] %s19
    %22 = dma.vmem_to_hbm [thread:$0]  %s18, 128, %s20, [#allocation1]
    %24 = dma.done [#allocation1], 128
    %25 = vsyncpa [#allocation1], 1

// kernel: tsti_encoder_forward.1
$region0: #{tsti_encoder_forward.1}
  #allocation0 [shape = 'u32[]', space=smem, size = 0x4, offset = 0x4, fixed_abs, tag = 'smem constant byte address 0x4 - core index']
  #allocation1 [shape = 'u32[72,128]{1,0:T(1,128)}', space=vmem, size = 0x9000, scoped, tag = 'internal scratch']
  #allocation2 [shape = 'f32[2,2,128]{2,1,0:T(2,128)}', space=vmem, size = 0x800, scoped, tag = 'scratch operand']
  %s0 = inlined_call_operand.vmem [shape: bf16[2,2,36], index: 0, kind: input, shape index: {}]
  %s1 = inlined_call_operand.vmem [shape: bf16[9,32], index: 1, kind: input, shape index: {}]
  %s2 = inlined_call_operand.vmem [shape: f32[1,32], index: 2, kind: input, shape index: {}]
  %s3 = inlined_call_operand.vmem [shape: bf16[128,128], index: 3, kind: input, shape index: {}]
  %s4 = inlined_call_operand.vmem [shape: bf16[128,128], index: 4, kind: input, shape index: {}]
  %s5 = inlined_call_operand.vmem [shape: bf16[3,32,64], index: 5, kind: input, shape index: {}]
  %s6 = inlined_call_operand.vmem [shape: bf16[3,64,32], index: 6, kind: input, shape index: {}]
  %s7 = inlined_call_operand.vmem [shape: f32[3,6,64], index: 7, kind: input, shape index: {}]
  %s8 = inlined_call_operand.vmem [shape: f32[2,2,128], index: 8, kind: output, shape index: {}]
  %s9 = sld [smem:[#allocation0]]
  $region73: #{tsti_encoder_forward.1} parent=0
    _
  %s11 = ssub.s32 1, %s9
  %s12 = scalar_select 0, %s11, %s9
  loop: start=0, step=1, limit=5
  $region2: #{tsti_encoder_forward.1} parent=0 // loop_pre_header
    _
  $region3: #{tsti_encoder_forward.1} parent=0 // loop_header
    %s14 = sphi 0, %s18
    %p15 = scmp.ge.s32.totalorder %s14, 5
    %s21 = sphi 0, %s33
    %s22 = sphi 0, %s29
    %s23 = sphi 0, %s21
    %s24 = sphi 0, %s22
    %s25 = sphi 0, %s23
    %s26 = sphi 0, %s24
    %s36 = sphi 0, %s38
    %s39 = sphi 0, %s36
    %s40 = sphi 0, %s39
    %s56 = sphi 0, %s40
    %s60 = sphi 0, %s60
    %s62 = sphi 0, %s60
    %s63 = sphi 0, %s62
    %s77 = sphi 0, %s63
    %s81 = sphi 0, %s81
    %s83 = sphi 0, %s81
    %s84 = sphi 0, %s83
    %s98 = sphi 0, %s84
    %s102 = sphi 0, %s102
    %s104 = sphi 0, %s102
    %s105 = sphi 0, %s104
    %s119 = sphi 0, %s105
    %s123 = sphi 0, %s123
    %s125 = sphi 0, %s123
    %s126 = sphi 0, %s125
    %s140 = sphi 0, %s126
    %s146 = sphi 0, %s148
    %s149 = sphi 0, %s146
    %s150 = sphi 0, %s149
    %s166 = sphi 0, %s150
    %s172 = sphi 0, %s174
    %s175 = sphi 0, %s172
    %s176 = sphi 0, %s175
    %s192 = sphi 0, %s176
    %s198 = sphi 0, %s200
    %s201 = sphi 0, %s198
    %s202 = sphi 0, %s201
    %s218 = sphi 0, %s202
    %s224 = sphi 0, %s226
    %s227 = sphi 0, %s224
    %s228 = sphi 0, %s227
    %s244 = sphi 0, %s228
  $region4: #{tsti_encoder_forward.1} parent=0 // loop_header_branch
    %17 = sbr.rel (%p15) target = $region8
  $region5: #{tsti_encoder_forward.1} parent=0 // loop_body
    %s19 = ssub.s32 %s14, 1
    %s20 = ssub.s32 %s14, 2
    %s27 = sadd.s32 1, %s22
    %p28 = scmp.ge.s32.totalorder %s27, 3
    %s29 = scalar_select %p28, 0, %s27
    %s30 = sadd.s32 1, %s21
    %s31 = scalar_select %p28, %s30, %s21
    %p32 = scmp.ge.s32.totalorder %s31, 1
    %s33 = scalar_select %p32, 0, %s31
    %s34 = ssub.s32 %s21, %s33
    %p35 = scmp.eq.s32.totalorder %s34, 0
    %s37 = sadd.s32 %s36, 1
    %s38 = scalar_select %p35, %s36, %s37
    %p41 = pneg %p35
    %p42 = scmp.eq.s32.totalorder %s14, 2
    %p43 = por %p41, %p42
    %p44 = scmp.ne.s32.totalorder %s36, %s39
    %p45 = scmp.eq.s32.totalorder %s14, 0
    %p46 = por %p44, %p45
    %p47 = scmp.ne.s32.totalorder %s36, %s39
    %p48 = scmp.eq.s32.totalorder %s19, 2
    %p49 = por %p47, %p48
    %p50 = scmp.ne.s32.totalorder %s39, %s40
    %p51 = scmp.eq.s32.totalorder %s19, 0
    %p52 = por %p50, %p51
    %p53 = scmp.ne.s32.totalorder %s39, %s40
    %p54 = scmp.eq.s32.totalorder %s20, 2
    %p55 = por %p53, %p54
    %p57 = scmp.ne.s32.totalorder %s40, %s56
    %p58 = scmp.eq.s32.totalorder %s20, 0
    %p59 = por %p57, %p58
    %s61 = sadd.s32 %s60, 1
    %p64 = scmp.eq.s32.totalorder %s14, 2
    %p65 = scmp.ne.s32.totalorder %s60, %s62
    %p66 = scmp.eq.s32.totalorder %s14, 0
    %p67 = por %p65, %p66
    %p68 = scmp.ne.s32.totalorder %s60, %s62
    %p69 = scmp.eq.s32.totalorder %s19, 2
    %p70 = por %p68, %p69
    %p71 = scmp.ne.s32.totalorder %s62, %s63
    %p72 = scmp.eq.s32.totalorder %s19, 0
    %p73 = por %p71, %p72
    %p74 = scmp.ne.s32.totalorder %s62, %s63
    %p75 = scmp.eq.s32.totalorder %s20, 2
    %p76 = por %p74, %p75
    %p78 = scmp.ne.s32.totalorder %s63, %s77
    %p79 = scmp.eq.s32.totalorder %s20, 0
    %p80 = por %p78, %p79
    %s82 = sadd.s32 %s81, 1
    %p85 = scmp.eq.s32.totalorder %s14, 2
    %p86 = scmp.ne.s32.totalorder %s81, %s83
    %p87 = scmp.eq.s32.totalorder %s14, 0
    %p88 = por %p86, %p87
    %p89 = scmp.ne.s32.totalorder %s81, %s83
    %p90 = scmp.eq.s32.totalorder %s19, 2
    %p91 = por %p89, %p90
    %p92 = scmp.ne.s32.totalorder %s83, %s84
    %p93 = scmp.eq.s32.totalorder %s19, 0
    %p94 = por %p92, %p93
    %p95 = scmp.ne.s32.totalorder %s83, %s84
    %p96 = scmp.eq.s32.totalorder %s20, 2
    %p97 = por %p95, %p96
    %p99 = scmp.ne.s32.totalorder %s84, %s98
    %p100 = scmp.eq.s32.totalorder %s20, 0
    %p101 = por %p99, %p100
    %s103 = sadd.s32 %s102, 1
    %p106 = scmp.eq.s32.totalorder %s14, 2
    %p107 = scmp.ne.s32.totalorder %s102, %s104
    %p108 = scmp.eq.s32.totalorder %s14, 0
    %p109 = por %p107, %p108
    %p110 = scmp.ne.s32.totalorder %s102, %s104
    %p111 = scmp.eq.s32.totalorder %s19, 2
    %p112 = por %p110, %p111
    %p113 = scmp.ne.s32.totalorder %s104, %s105
    %p114 = scmp.eq.s32.totalorder %s19, 0
    %p115 = por %p113, %p114
    %p116 = scmp.ne.s32.totalorder %s104, %s105
    %p117 = scmp.eq.s32.totalorder %s20, 2
    %p118 = por %p116, %p117
    %p120 = scmp.ne.s32.totalorder %s105, %s119
    %p121 = scmp.eq.s32.totalorder %s20, 0
    %p122 = por %p120, %p121
    %s124 = sadd.s32 %s123, 1
    %p127 = scmp.eq.s32.totalorder %s14, 2
    %p128 = scmp.ne.s32.totalorder %s123, %s125
    %p129 = scmp.eq.s32.totalorder %s14, 0
    %p130 = por %p128, %p129
    %p131 = scmp.ne.s32.totalorder %s123, %s125
    %p132 = scmp.eq.s32.totalorder %s19, 2
    %p133 = por %p131, %p132
    %p134 = scmp.ne.s32.totalorder %s125, %s126
    %p135 = scmp.eq.s32.totalorder %s19, 0
    %p136 = por %p134, %p135
    %p137 = scmp.ne.s32.totalorder %s125, %s126
    %p138 = scmp.eq.s32.totalorder %s20, 2
    %p139 = por %p137, %p138
    %p141 = scmp.ne.s32.totalorder %s126, %s140
    %p142 = scmp.eq.s32.totalorder %s20, 0
    %p143 = por %p141, %p142
    %s144 = ssub.s32 %s22, %s29
    %p145 = scmp.eq.s32.totalorder %s144, 0
    %s147 = sadd.s32 %s146, 1
    %s148 = scalar_select %p145, %s146, %s147
    %p151 = pneg %p145
    %p152 = scmp.eq.s32.totalorder %s14, 2
    %p153 = por %p151, %p152
    %p154 = scmp.ne.s32.totalorder %s146, %s149
    %p155 = scmp.eq.s32.totalorder %s14, 0
    %p156 = por %p154, %p155
    %p157 = scmp.ne.s32.totalorder %s146, %s149
    %p158 = scmp.eq.s32.totalorder %s19, 2
    %p159 = por %p157, %p158
    %p160 = scmp.ne.s32.totalorder %s149, %s150
    %p161 = scmp.eq.s32.totalorder %s19, 0
    %p162 = por %p160, %p161
    %p163 = scmp.ne.s32.totalorder %s149, %s150
    %p164 = scmp.eq.s32.totalorder %s20, 2
    %p165 = por %p163, %p164
    %p167 = scmp.ne.s32.totalorder %s150, %s166
    %p168 = scmp.eq.s32.totalorder %s20, 0
    %p169 = por %p167, %p168
    %s170 = ssub.s32 %s22, %s29
    %p171 = scmp.eq.s32.totalorder %s170, 0
    %s173 = sadd.s32 %s172, 1
    %s174 = scalar_select %p171, %s172, %s173
    %p177 = pneg %p171
    %p178 = scmp.eq.s32.totalorder %s14, 2
    %p179 = por %p177, %p178
    %p180 = scmp.ne.s32.totalorder %s172, %s175
    %p181 = scmp.eq.s32.totalorder %s14, 0
    %p182 = por %p180, %p181
    %p183 = scmp.ne.s32.totalorder %s172, %s175
    %p184 = scmp.eq.s32.totalorder %s19, 2
    %p185 = por %p183, %p184
    %p186 = scmp.ne.s32.totalorder %s175, %s176
    %p187 = scmp.eq.s32.totalorder %s19, 0
    %p188 = por %p186, %p187
    %p189 = scmp.ne.s32.totalorder %s175, %s176
    %p190 = scmp.eq.s32.totalorder %s20, 2
    %p191 = por %p189, %p190
    %p193 = scmp.ne.s32.totalorder %s176, %s192
    %p194 = scmp.eq.s32.totalorder %s20, 0
    %p195 = por %p193, %p194
    %s196 = ssub.s32 %s22, %s29
    %p197 = scmp.eq.s32.totalorder %s196, 0
    %s199 = sadd.s32 %s198, 1
    %s200 = scalar_select %p197, %s198, %s199
    %p203 = pneg %p197
    %p204 = scmp.eq.s32.totalorder %s14, 2
    %p205 = por %p203, %p204
    %p206 = scmp.ne.s32.totalorder %s198, %s201
    %p207 = scmp.eq.s32.totalorder %s14, 0
    %p208 = por %p206, %p207
    %p209 = scmp.ne.s32.totalorder %s198, %s201
    %p210 = scmp.eq.s32.totalorder %s19, 2
    %p211 = por %p209, %p210
    %p212 = scmp.ne.s32.totalorder %s201, %s202
    %p213 = scmp.eq.s32.totalorder %s19, 0
    %p214 = por %p212, %p213
    %p215 = scmp.ne.s32.totalorder %s201, %s202
    %p216 = scmp.eq.s32.totalorder %s20, 2
    %p217 = por %p215, %p216
    %p219 = scmp.ne.s32.totalorder %s202, %s218
    %p220 = scmp.eq.s32.totalorder %s20, 0
    %p221 = por %p219, %p220
    %s222 = ssub.s32 %s21, %s33
    %p223 = scmp.eq.s32.totalorder %s222, 0
    %s225 = sadd.s32 %s224, 1
    %s226 = scalar_select %p223, %s224, %s225
    %p229 = pneg %p223
    %p230 = scmp.eq.s32.totalorder %s14, 2
    %p231 = por %p229, %p230
    %p232 = scmp.ne.s32.totalorder %s224, %s227
    %p233 = scmp.eq.s32.totalorder %s14, 0
    %p234 = por %p232, %p233
    %p235 = scmp.ne.s32.totalorder %s224, %s227
    %p236 = scmp.eq.s32.totalorder %s19, 2
    %p237 = por %p235, %p236
    %p238 = scmp.ne.s32.totalorder %s227, %s228
    %p239 = scmp.eq.s32.totalorder %s19, 0
    %p240 = por %p238, %p239
    %p241 = scmp.ne.s32.totalorder %s227, %s228
    %p242 = scmp.eq.s32.totalorder %s20, 2
    %p243 = por %p241, %p242
    %p245 = scmp.ne.s32.totalorder %s228, %s244
    %p246 = scmp.eq.s32.totalorder %s20, 0
    %p247 = por %p245, %p246
    %p248 = scmp.le.s32.totalorder 1, %s14
    %p249 = scmp.lt.s32.totalorder %s14, 4
    %p250 = pnand %p248, %p249
    %p251 = pneg %p250
    // Predicated region
    $region9: #{tsti_encoder_forward.1} parent=5 // pred_check
      _
    $region10: #{tsti_encoder_forward.1} parent=5 // pred_check_branch
      %253 = sbr.rel (%p250) target = $region12
    $region11: #{tsti_encoder_forward.1} parent=5 // pred_region
      %s254 = ssub.s32 %s14, 1
      // Predicated region
      $region13: #{tsti_encoder_forward.1} parent=11 // pred_check
        %p255 = pneg %p52
      $region14: #{tsti_encoder_forward.1} parent=11 // pred_check_branch
        %257 = sbr.rel (%p255) target = $region16
      $region15: #{tsti_encoder_forward.1} parent=11 // pred_region
        %p258 = scmp.lt.s32.totalorder %s23, 0
        %s259 = scalar_select %p258, %s23, 0
        %s260 = scalar_lea.vmem %s0, %s259
      $region16: #{tsti_encoder_forward.1} parent=11 // pred_fallthru
        _
      // Predicated region
      $region17: #{tsti_encoder_forward.1} parent=11 // pred_check
        %p261 = pneg %p73
      $region18: #{tsti_encoder_forward.1} parent=11 // pred_check_branch
        %263 = sbr.rel (%p261) target = $region20
      $region19: #{tsti_encoder_forward.1} parent=11 // pred_region
        _
      $region20: #{tsti_encoder_forward.1} parent=11 // pred_fallthru
        _
      // Predicated region
      $region21: #{tsti_encoder_forward.1} parent=11 // pred_check
        %p264 = pneg %p94
      $region22: #{tsti_encoder_forward.1} parent=11 // pred_check_branch
        %266 = sbr.rel (%p264) target = $region24
      $region23: #{tsti_encoder_forward.1} parent=11 // pred_region
        _
      $region24: #{tsti_encoder_forward.1} parent=11 // pred_fallthru
        _
      // Predicated region
      $region25: #{tsti_encoder_forward.1} parent=11 // pred_check
        %p267 = pneg %p115
      $region26: #{tsti_encoder_forward.1} parent=11 // pred_check_branch
        %269 = sbr.rel (%p267) target = $region28
      $region27: #{tsti_encoder_forward.1} parent=11 // pred_region
        _
      $region28: #{tsti_encoder_forward.1} parent=11 // pred_fallthru
        _
      // Predicated region
      $region29: #{tsti_encoder_forward.1} parent=11 // pred_check
        %p270 = pneg %p136
      $region30: #{tsti_encoder_forward.1} parent=11 // pred_check_branch
        %272 = sbr.rel (%p270) target = $region32
      $region31: #{tsti_encoder_forward.1} parent=11 // pred_region
        _
      $region32: #{tsti_encoder_forward.1} parent=11 // pred_fallthru
        _
    $region12: #{tsti_encoder_forward.1} parent=5 // pred_fallthru
      _
    %p273 = scmp.lt.s32.totalorder %s14, 3
    // Predicated region
    $region33: #{tsti_encoder_forward.1} parent=5 // pred_check
      %p274 = pneg %p273
    $region34: #{tsti_encoder_forward.1} parent=5 // pred_check_branch
      %276 = sbr.rel (%p274) target = $region36
    $region35: #{tsti_encoder_forward.1} parent=5 // pred_region
      // Predicated region
      $region37: #{tsti_encoder_forward.1} parent=35 // pred_check
        %p277 = pneg %p156
      $region38: #{tsti_encoder_forward.1} parent=35 // pred_check_branch
        %279 = sbr.rel (%p277) target = $region40
      $region39: #{tsti_encoder_forward.1} parent=35 // pred_region
        %p280 = scmp.lt.s32.totalorder %s22, 2
        %s281 = scalar_select %p280, %s22, 2
        %s282 = smul.addr %s281, 4
        %s283 = smul.addr %s282, 4
        %s284 = scalar_lea.vmem %s5, %s283
      $region40: #{tsti_encoder_forward.1} parent=35 // pred_fallthru
        _
      // Predicated region
      $region41: #{tsti_encoder_forward.1} parent=35 // pred_check
        %p285 = pneg %p182
      $region42: #{tsti_encoder_forward.1} parent=35 // pred_check_branch
        %287 = sbr.rel (%p285) target = $region44
      $region43: #{tsti_encoder_forward.1} parent=35 // pred_region
        %p288 = scmp.lt.s32.totalorder %s22, 2
        %s289 = scalar_select %p288, %s22, 2
        %s290 = smul.addr %s289, 8
        %s291 = smul.addr %s290, 4
        %s292 = scalar_lea.vmem %s6, %s291
      $region44: #{tsti_encoder_forward.1} parent=35 // pred_fallthru
        _
      // Predicated region
      $region45: #{tsti_encoder_forward.1} parent=35 // pred_check
        %p293 = pneg %p208
      $region46: #{tsti_encoder_forward.1} parent=35 // pred_check_branch
        %295 = sbr.rel (%p293) target = $region48
      $region47: #{tsti_encoder_forward.1} parent=35 // pred_region
        %p296 = scmp.lt.s32.totalorder %s22, 2
        %s297 = scalar_select %p296, %s22, 2
        %s298 = smul.addr %s297, 8
        %s299 = scalar_lea.vmem %s7, %s298
      $region48: #{tsti_encoder_forward.1} parent=35 // pred_fallthru
        _
    $region36: #{tsti_encoder_forward.1} parent=5 // pred_fallthru
      _
    %p300 = scmp.le.s32.totalorder 1, %s14
    %p301 = scmp.lt.s32.totalorder %s14, 4
    %p302 = pnand %p300, %p301
    %p303 = pneg %p302
    // Predicated region
    $region49: #{tsti_encoder_forward.1} parent=5 // pred_check
      _
    $region50: #{tsti_encoder_forward.1} parent=5 // pred_check_branch
      %305 = sbr.rel (%p302) target = $region52
    $region51: #{tsti_encoder_forward.1} parent=5 // pred_region
      %s306 = ssub.s32 %s14, 1
      %p307 = scmp.lt.s32.totalorder %s23, 0
      %s308 = scalar_select %p307, %s23, 0
      %s309 = scalar_lea.vmem %s0, %s308
      %p310 = pneg %p52
      %p311 = pneg %p49
      %p312 = pneg %p73
      %p313 = pneg %p70
      %p314 = pneg %p94
      %p315 = pneg %p91
      %p316 = pneg %p115
      %p317 = pneg %p112
      %p318 = pneg %p136
      %p319 = pneg %p133
      %p320 = scmp.lt.s32.totalorder %s24, 2
      %s321 = scalar_select %p320, %s24, 2
      %s322 = smul.addr %s321, 4
      %s323 = smul.addr %s322, 4
      %s324 = scalar_lea.vmem %s5, %s323
      %p325 = pneg %p162
      %p326 = pneg %p159
      %p327 = scmp.lt.s32.totalorder %s24, 2
      %s328 = scalar_select %p327, %s24, 2
      %s329 = smul.addr %s328, 8
      %s330 = smul.addr %s329, 4
      %s331 = scalar_lea.vmem %s6, %s330
      %p332 = pneg %p188
      %p333 = pneg %p185
      %p334 = scmp.lt.s32.totalorder %s24, 2
      %s335 = scalar_select %p334, %s24, 2
      %s336 = smul.addr %s335, 8
      %s337 = scalar_lea.vmem %s7, %s336
      %p338 = pneg %p214
      %p339 = pneg %p211
      %p340 = pneg %p240
      %p341 = pneg %p237
      %p342 = scmp.lt.s32.totalorder %s23, 0
      %s343 = scalar_select %p342, %s23, 0
      %s344 = smul.addr %s343, 2
      %s345 = scalar_lea.vmem %s8, %s344
      %p346 = scmp.lt.s32.totalorder %s23, 0
      %s347 = scalar_select %p346, %s23, 0
      %s348 = scalar_lea.vmem %s0, %s347
      %p349 = scmp.lt.s32.totalorder %s24, 2
      %s350 = scalar_select %p349, %s24, 2
      %s351 = smul.addr %s350, 4
      %s352 = smul.addr %s351, 4
      %s353 = scalar_lea.vmem %s5, %s352
      %p354 = scmp.lt.s32.totalorder %s24, 2
      %s355 = scalar_select %p354, %s24, 2
      %s356 = smul.addr %s355, 8
      %s357 = smul.addr %s356, 4
      %s358 = scalar_lea.vmem %s6, %s357
      %p359 = scmp.lt.s32.totalorder %s24, 2
      %s360 = scalar_select %p359, %s24, 2
      %s361 = smul.addr %s360, 8
      %s362 = scalar_lea.vmem %s7, %s361
      %p363 = scmp.lt.s32.totalorder %s23, 0
      %s364 = scalar_select %p363, %s23, 0
      %s365 = smul.addr %s364, 2
      %s366 = scalar_lea.vmem %s8, %s365
      %p368 = scmp.eq.s32.totalorder %s24, 0
      // Predicated region
      $region53: #{tsti_encoder_forward.1} parent=51 // pred_check
        %p369 = pneg %p368
      $region54: #{tsti_encoder_forward.1} parent=51 // pred_check_branch
        %371 = sbr.rel (%p369) target = $region56
      $region55: #{tsti_encoder_forward.1} parent=51 // pred_region
        %v372 = vld [vmem:[%s1] sm:$0xf]
        %v373 = vld [vmem:[%s1 + $0x4] sm:$0x1]
        %v374 = vld [vmem:[%s2] sm:$0x1]
        %v375 = vld [vmem:[%s348] sm:$0x1]
        %v377 = vperm.slane %v374, 0
        %v381 = vunpack.c.l.b16 %v372
        %v382 = vunpack.c.l.b16 %v373
        %v383 = vpack.c.b16 %v382, %v381
        %vm384 = vcmask 72704
        %v386 = vsel %vm384, %v375, 0
        %vm388 = vcmask 1043456
        %vm389 = vcmask 1044480
        %v390 = vsel %vm388, 4294967295, 65535
        %v391 = vsel %vm389, %v390, 0
        %v393 = vand.u32 %v383, %v391
        %395 = vmatpush.bf16.msra.mxu0 0
        %396 = vmatpush.bf16.msra.mxu0 0
        %397 = vmatpush.bf16.msra.mxu0 0
        %398 = vmatpush.bf16.msra.mxu0 0
        %399 = vmatpush.bf16.msra.mxu0 0
        %400 = vmatpush.bf16.msra.mxu0 0
        %401 = vmatpush.bf16.msra.mxu0 0
        %402 = vmatpush.bf16.msra.mxu0 %v393
        %403 = vmatmul.bf16.gmra.mxu0 %v386
        %v404 = vpop.f32.mrf.mxu0
        %v405 = vadd.f32 %v377, %v404
        %v406 = vpop.f32.mrf.mxu0
        %407 = vdwg.mxu0
        %vm408 = vcmask 254976
        %409 = vst.msk [vmem:[#allocation2] sm:$0x3] %vm408, %v405
        %410 = vst [vmem:[#allocation1] ss:$9 sm:$0xff] %v375
        %v411 = vld [vmem:[#allocation1] sm:$0xff]
        %413 = vrot.lane.b32.xlu0 %v411, 119
        %v414 = vpop.permute.xlu0 %413
        %v416 = vsel %vm384, %v414, 0
        %418 = vmatpush.bf16.msra.mxu0 0
        %419 = vmatpush.bf16.msra.mxu0 0
        %420 = vmatpush.bf16.msra.mxu0 0
        %421 = vmatpush.bf16.msra.mxu0 0
        %422 = vmatpush.bf16.msra.mxu0 0
        %423 = vmatpush.bf16.msra.mxu0 0
        %424 = vmatpush.bf16.msra.mxu0 0
        %425 = vmatpush.bf16.msra.mxu0 %v393
        %426 = vmatmul.bf16.gmra.mxu0 %v416
        %v427 = vpop.f32.mrf.mxu0
        %v428 = vadd.f32 %v377, %v427
        %v429 = vpop.f32.mrf.mxu0
        %430 = vdwg.mxu0
        %432 = vrot.lane.b32.xlu0 %v428, 32
        %v433 = vpop.permute.xlu0 %432
        %vm435 = vcmask 517376
        %436 = vst.msk [vmem:[#allocation2] sm:$0x3] %vm435, %v433
        %437 = vst [vmem:[#allocation1] ss:$9 sm:$0xff] %v375
        %v438 = vld [vmem:[#allocation1] sm:$0xff]
        %440 = vrot.lane.b32.xlu0 %v438, 110
        %v441 = vpop.permute.xlu0 %440
        %v443 = vsel %vm384, %v441, 0
        %445 = vmatpush.bf16.msra.mxu0 0
        %446 = vmatpush.bf16.msra.mxu0 0
        %447 = vmatpush.bf16.msra.mxu0 0
        %448 = vmatpush.bf16.msra.mxu0 0
        %449 = vmatpush.bf16.msra.mxu0 0
        %450 = vmatpush.bf16.msra.mxu0 0
        %451 = vmatpush.bf16.msra.mxu0 0
        %452 = vmatpush.bf16.msra.mxu0 %v393
        %453 = vmatmul.bf16.gmra.mxu0 %v443
        %v454 = vpop.f32.mrf.mxu0
        %v455 = vadd.f32 %v377, %v454
        %v456 = vpop.f32.mrf.mxu0
        %457 = vdwg.mxu0
        %459 = vrot.lane.b32.xlu0 %v455, 64
        %v460 = vpop.permute.xlu0 %459
        %vm462 = vcmask 779776
        %463 = vst.msk [vmem:[#allocation2] sm:$0x3] %vm462, %v460
        %464 = vst [vmem:[#allocation1] ss:$9 sm:$0xff] %v375
        %v465 = vld [vmem:[#allocation1] sm:$0xff]
        %467 = vrot.lane.b32.xlu0 %v465, 101
        %v468 = vpop.permute.xlu0 %467
        %v470 = vsel %vm384, %v468, 0
        %472 = vmatpush.bf16.msra.mxu0 0
        %473 = vmatpush.bf16.msra.mxu0 0
        %474 = vmatpush.bf16.msra.mxu0 0
        %475 = vmatpush.bf16.msra.mxu0 0
        %476 = vmatpush.bf16.msra.mxu0 0
        %477 = vmatpush.bf16.msra.mxu0 0
        %478 = vmatpush.bf16.msra.mxu0 0
        %479 = vmatpush.bf16.msra.mxu0 %v393
        %480 = vmatmul.bf16.gmra.mxu0 %v470
        %v481 = vpop.f32.mrf.mxu0
        %v482 = vadd.f32 %v377, %v481
        %v483 = vpop.f32.mrf.mxu0
        %484 = vdwg.mxu0
        %486 = vrot.lane.b32.xlu0 %v482, 96
        %v487 = vpop.permute.xlu0 %486
        %vm489 = vcmask 1042176
        %490 = vst.msk [vmem:[#allocation2] sm:$0x3] %vm489, %v487
        %s491 = scalar_lea.vmem %s348, 1
        %v492 = vld [vmem:[%s491] sm:$0x1]
        %v494 = vsel %vm384, %v492, 0
        %496 = vmatpush.bf16.msra.mxu0 0
        %497 = vmatpush.bf16.msra.mxu0 0
        %498 = vmatpush.bf16.msra.mxu0 0
        %499 = vmatpush.bf16.msra.mxu0 0
        %500 = vmatpush.bf16.msra.mxu0 0
        %501 = vmatpush.bf16.msra.mxu0 0
        %502 = vmatpush.bf16.msra.mxu0 0
        %503 = vmatpush.bf16.msra.mxu0 %v393
        %504 = vmatmul.bf16.gmra.mxu0 %v494
        %v505 = vpop.f32.mrf.mxu0
        %v506 = vadd.f32 0.0, %v505
        %v507 = vpop.f32.mrf.mxu0
        %508 = vdwg.mxu0
        %s509 = scalar_lea.vmem [#allocation2], 2
        %510 = vst.msk [vmem:[%s509] sm:$0x3] %vm408, %v506
        %511 = vst [vmem:[#allocation1] ss:$9 sm:$0xff] %v492
        %v512 = vld [vmem:[#allocation1] sm:$0xff]
        %514 = vrot.lane.b32.xlu0 %v512, 119
        %v515 = vpop.permute.xlu0 %514
        %v517 = vsel %vm384, %v515, 0
        %519 = vmatpush.bf16.msra.mxu0 0
        %520 = vmatpush.bf16.msra.mxu0 0
        %521 = vmatpush.bf16.msra.mxu0 0
        %522 = vmatpush.bf16.msra.mxu0 0
        %523 = vmatpush.bf16.msra.mxu0 0
        %524 = vmatpush.bf16.msra.mxu0 0
        %525 = vmatpush.bf16.msra.mxu0 0
        %526 = vmatpush.bf16.msra.mxu0 %v393
        %527 = vmatmul.bf16.gmra.mxu0 %v517
        %v528 = vpop.f32.mrf.mxu0
        %v529 = vadd.f32 0.0, %v528
        %v530 = vpop.f32.mrf.mxu0
        %531 = vdwg.mxu0
        %533 = vrot.lane.b32.xlu0 %v529, 32
        %v534 = vpop.permute.xlu0 %533
        %536 = vst.msk [vmem:[%s509] sm:$0x3] %vm435, %v534
        %537 = vst [vmem:[#allocation1] ss:$9 sm:$0xff] %v492
        %v538 = vld [vmem:[#allocation1] sm:$0xff]
        %540 = vrot.lane.b32.xlu0 %v538, 110
        %v541 = vpop.permute.xlu0 %540
        %v543 = vsel %vm384, %v541, 0
        %545 = vmatpush.bf16.msra.mxu0 0
        %546 = vmatpush.bf16.msra.mxu0 0
        %547 = vmatpush.bf16.msra.mxu0 0
        %548 = vmatpush.bf16.msra.mxu0 0
        %549 = vmatpush.bf16.msra.mxu0 0
        %550 = vmatpush.bf16.msra.mxu0 0
        %551 = vmatpush.bf16.msra.mxu0 0
        %552 = vmatpush.bf16.msra.mxu0 %v393
        %553 = vmatmul.bf16.gmra.mxu0 %v543
        %v554 = vpop.f32.mrf.mxu0
        %v555 = vadd.f32 0.0, %v554
        %v556 = vpop.f32.mrf.mxu0
        %557 = vdwg.mxu0
        %559 = vrot.lane.b32.xlu0 %v555, 64
        %v560 = vpop.permute.xlu0 %559
        %562 = vst.msk [vmem:[%s509] sm:$0x3] %vm462, %v560
        %563 = vst [vmem:[#allocation1] ss:$9 sm:$0xff] %v492
        %v564 = vld [vmem:[#allocation1] sm:$0xff]
        %566 = vrot.lane.b32.xlu0 %v564, 101
        %v567 = vpop.permute.xlu0 %566
        %v569 = vsel %vm384, %v567, 0
        %571 = vmatpush.bf16.msra.mxu0 0
        %572 = vmatpush.bf16.msra.mxu0 0
        %573 = vmatpush.bf16.msra.mxu0 0
        %574 = vmatpush.bf16.msra.mxu0 0
        %575 = vmatpush.bf16.msra.mxu0 0
        %576 = vmatpush.bf16.msra.mxu0 0
        %577 = vmatpush.bf16.msra.mxu0 0
        %578 = vmatpush.bf16.msra.mxu0 %v393
        %579 = vmatmul.bf16.gmra.mxu0 %v569
        %v580 = vpop.f32.mrf.mxu0
        %v581 = vadd.f32 0.0, %v580
        %v582 = vpop.f32.mrf.mxu0
        %583 = vdwg.mxu0
        %585 = vrot.lane.b32.xlu0 %v581, 96
        %v586 = vpop.permute.xlu0 %585
        %588 = vst.msk [vmem:[%s509] sm:$0x3] %vm489, %v586
      $region56: #{tsti_encoder_forward.1} parent=51 // pred_fallthru
        _
      %v589 = vld [vmem:[#allocation2] sm:$0x3]
      %s590 = scalar_lea.vmem [#allocation2], 2
      %v591 = vld [vmem:[%s590] sm:$0x3]
      %v592 = vadd.f32 %v589, %v591
      %v593 = vmul.f32 %v592, 0.35355338
      %v594 = vsub.f32 %v589, %v591
      %v595 = vld [vmem:[%s3] sm:$0xf]
      %v596 = vld [vmem:[%s3 + $0x4] sm:$0xf]
      %v597 = vld [vmem:[%s3 + $0x8] sm:$0xf]
      %v598 = vld [vmem:[%s3 + $0xc] sm:$0xf]
      %v599 = vld [vmem:[%s3 + $0x10] sm:$0xf]
      %v600 = vld [vmem:[%s3 + $0x14] sm:$0xf]
      %v601 = vld [vmem:[%s3 + $0x18] sm:$0xf]
      %v602 = vld [vmem:[%s3 + $0x1c] sm:$0xf]
      %v603 = vld [vmem:[%s3 + $0x20] sm:$0xf]
      %v604 = vld [vmem:[%s3 + $0x24] sm:$0xf]
      %v605 = vld [vmem:[%s3 + $0x28] sm:$0xf]
      %v606 = vld [vmem:[%s3 + $0x2c] sm:$0xf]
      %v607 = vld [vmem:[%s3 + $0x30] sm:$0xf]
      %v608 = vld [vmem:[%s3 + $0x34] sm:$0xf]
      %v609 = vld [vmem:[%s3 + $0x38] sm:$0xf]
      %v610 = vld [vmem:[%s3 + $0x3c] sm:$0xf]
      %v611 = vpack.c.bf16 %v594, %v594
      %v628 = vunpack.c.l.b16 %v595
      %v629 = vunpack.c.l.b16 %v596
      %v630 = vunpack.c.l.b16 %v597
      %v631 = vunpack.c.l.b16 %v598
      %v632 = vunpack.c.l.b16 %v599
      %v633 = vunpack.c.l.b16 %v600
      %v634 = vunpack.c.l.b16 %v601
      %v635 = vunpack.c.l.b16 %v602
      %v636 = vunpack.c.l.b16 %v603
      %v637 = vunpack.c.l.b16 %v604
      %v638 = vunpack.c.l.b16 %v605
      %v639 = vunpack.c.l.b16 %v606
      %v640 = vunpack.c.l.b16 %v607
      %v641 = vunpack.c.l.b16 %v608
      %v642 = vunpack.c.l.b16 %v609
      %v643 = vunpack.c.l.b16 %v610
      %v644 = vpack.c.b16 %v629, %v628
      %v645 = vpack.c.b16 %v631, %v630
      %v646 = vpack.c.b16 %v633, %v632
      %v647 = vpack.c.b16 %v635, %v634
      %v648 = vpack.c.b16 %v637, %v636
      %v649 = vpack.c.b16 %v639, %v638
      %v650 = vpack.c.b16 %v641, %v640
      %v651 = vpack.c.b16 %v643, %v642
      %660 = vmatpush.bf16.msra.mxu0 %v651
      %661 = vmatpush.bf16.msra.mxu0 %v650
      %662 = vmatpush.bf16.msra.mxu0 %v649
      %663 = vmatpush.bf16.msra.mxu0 %v648
      %664 = vmatpush.bf16.msra.mxu0 %v647
      %665 = vmatpush.bf16.msra.mxu0 %v646
      %666 = vmatpush.bf16.msra.mxu0 %v645
      %667 = vmatpush.bf16.msra.mxu0 %v644
      %668 = vmatmul.bf16.gmra.mxu0 %v611
      %v669 = vpop.f32.mrf.mxu0
      %v670 = vadd.f32 0.0, %v669
      %v671 = vpop.f32.mrf.mxu0
      %672 = vdwg.mxu0
      %v673 = vpack.c.bf16 %v593, %v593
      %674 = vmatpush.bf16.msra.mxu0 %v651
      %675 = vmatpush.bf16.msra.mxu0 %v650
      %676 = vmatpush.bf16.msra.mxu0 %v649
      %677 = vmatpush.bf16.msra.mxu0 %v648
      %678 = vmatpush.bf16.msra.mxu0 %v647
      %679 = vmatpush.bf16.msra.mxu0 %v646
      %680 = vmatpush.bf16.msra.mxu0 %v645
      %681 = vmatpush.bf16.msra.mxu0 %v644
      %682 = vmatmul.bf16.gmra.mxu0 %v673
      %v683 = vpop.f32.mrf.mxu0
      %v684 = vadd.f32 0.0, %v683
      %v685 = vpop.f32.mrf.mxu0
      %686 = vdwg.mxu0
      %v687 = vmul.f32 %v593, %v670
      %v688 = vmul.f32 %v687, %v589
      %v689 = vmul.f32 %v594, %v684
      %v690 = vmul.f32 %v689, %v589
      %v691 = vld [vmem:[%s4] sm:$0xf]
      %v692 = vld [vmem:[%s4 + $0x4] sm:$0xf]
      %v693 = vld [vmem:[%s4 + $0x8] sm:$0xf]
      %v694 = vld [vmem:[%s4 + $0xc] sm:$0xf]
      %v695 = vld [vmem:[%s4 + $0x10] sm:$0xf]
      %v696 = vld [vmem:[%s4 + $0x14] sm:$0xf]
      %v697 = vld [vmem:[%s4 + $0x18] sm:$0xf]
      %v698 = vld [vmem:[%s4 + $0x1c] sm:$0xf]
      %v699 = vld [vmem:[%s4 + $0x20] sm:$0xf]
      %v700 = vld [vmem:[%s4 + $0x24] sm:$0xf]
      %v701 = vld [vmem:[%s4 + $0x28] sm:$0xf]
      %v702 = vld [vmem:[%s4 + $0x2c] sm:$0xf]
      %v703 = vld [vmem:[%s4 + $0x30] sm:$0xf]
      %v704 = vld [vmem:[%s4 + $0x34] sm:$0xf]
      %v705 = vld [vmem:[%s4 + $0x38] sm:$0xf]
      %v706 = vld [vmem:[%s4 + $0x3c] sm:$0xf]
      %v707 = vpack.c.bf16 %v688, %v688
      %v724 = vunpack.c.l.b16 %v691
      %v725 = vunpack.c.l.b16 %v692
      %v726 = vunpack.c.l.b16 %v693
      %v727 = vunpack.c.l.b16 %v694
      %v728 = vunpack.c.l.b16 %v695
      %v729 = vunpack.c.l.b16 %v696
      %v730 = vunpack.c.l.b16 %v697
      %v731 = vunpack.c.l.b16 %v698
      %v732 = vunpack.c.l.b16 %v699
      %v733 = vunpack.c.l.b16 %v700
      %v734 = vunpack.c.l.b16 %v701
      %v735 = vunpack.c.l.b16 %v702
      %v736 = vunpack.c.l.b16 %v703
      %v737 = vunpack.c.l.b16 %v704
      %v738 = vunpack.c.l.b16 %v705
      %v739 = vunpack.c.l.b16 %v706
      %v740 = vpack.c.b16 %v725, %v724
      %v741 = vpack.c.b16 %v727, %v726
      %v742 = vpack.c.b16 %v729, %v728
      %v743 = vpack.c.b16 %v731, %v730
      %v744 = vpack.c.b16 %v733, %v732
      %v745 = vpack.c.b16 %v735, %v734
      %v746 = vpack.c.b16 %v737, %v736
      %v747 = vpack.c.b16 %v739, %v738
      %756 = vmatpush.bf16.msra.mxu0 %v747
      %757 = vmatpush.bf16.msra.mxu0 %v746
      %758 = vmatpush.bf16.msra.mxu0 %v745
      %759 = vmatpush.bf16.msra.mxu0 %v744
      %760 = vmatpush.bf16.msra.mxu0 %v743
      %761 = vmatpush.bf16.msra.mxu0 %v742
      %762 = vmatpush.bf16.msra.mxu0 %v741
      %763 = vmatpush.bf16.msra.mxu0 %v740
      %764 = vmatmul.bf16.gmra.mxu0 %v707
      %v765 = vpop.f32.mrf.mxu0
      %v766 = vadd.f32 0.0, %v765
      %v767 = vpop.f32.mrf.mxu0
      %768 = vdwg.mxu0
      %v769 = vpack.c.bf16 %v690, %v690
      %770 = vmatpush.bf16.msra.mxu0 %v747
      %771 = vmatpush.bf16.msra.mxu0 %v746
      %772 = vmatpush.bf16.msra.mxu0 %v745
      %773 = vmatpush.bf16.msra.mxu0 %v744
      %774 = vmatpush.bf16.msra.mxu0 %v743
      %775 = vmatpush.bf16.msra.mxu0 %v742
      %776 = vmatpush.bf16.msra.mxu0 %v741
      %777 = vmatpush.bf16.msra.mxu0 %v740
      %778 = vmatmul.bf16.gmra.mxu0 %v769
      %v779 = vpop.f32.mrf.mxu0
      %v780 = vadd.f32 0.0, %v779
      %v781 = vpop.f32.mrf.mxu0
      %782 = vdwg.mxu0
      %v783 = vld [vmem:[%s362] sm:$0x3f]
      %v784 = vld [vmem:[%s353] sm:$0xf]
      %v785 = vld [vmem:[%s353 + $0x4] sm:$0xf]
      %v786 = vld [vmem:[%s353 + $0x8] sm:$0xf]
      %v787 = vld [vmem:[%s353 + $0xc] sm:$0xf]
      %v788 = vld [vmem:[%s358] sm:$0xf]
      %v789 = vld [vmem:[%s358 + $0x4] sm:$0xf]
      %v790 = vld [vmem:[%s358 + $0x8] sm:$0xf]
      %v791 = vld [vmem:[%s358 + $0xc] sm:$0xf]
      %v792 = vld [vmem:[%s358 + $0x10] sm:$0xf]
      %v793 = vld [vmem:[%s358 + $0x14] sm:$0xf]
      %v794 = vld [vmem:[%s358 + $0x18] sm:$0xf]
      %v795 = vld [vmem:[%s358 + $0x1c] sm:$0xf]
      %v796 = vadd.f32 %v589, %v766
      %v797 = vperm.slane %v783, 2
      %v798 = vmul.f32 %v796, %v797
      %v799 = vperm.slane %v783, 3
      %v800 = vadd.f32 %v798, %v799
      %v801 = vpack.c.bf16 %v800, %v800
      %v802 = vperm.slane %v783, 0
      %v807 = vunpack.c.l.b16 %v784
      %v808 = vunpack.c.l.b16 %v785
      %v809 = vunpack.c.l.b16 %v786
      %v810 = vunpack.c.l.b16 %v787
      %v811 = vpack.c.b16 %v808, %v807
      %v812 = vpack.c.b16 %v810, %v809
      %vm815 = vcmask 261120
      %v817 = vsel %vm815, %v801, 0
      %819 = vmatpush.bf16.msra.mxu0 0
      %820 = vmatpush.bf16.msra.mxu0 0
      %821 = vmatpush.bf16.msra.mxu0 0
      %822 = vmatpush.bf16.msra.mxu0 0
      %823 = vmatpush.bf16.msra.mxu0 0
      %824 = vmatpush.bf16.msra.mxu0 0
      %825 = vmatpush.bf16.msra.mxu0 %v812
      %826 = vmatpush.bf16.msra.mxu0 %v811
      %827 = vmatmul.bf16.gmra.mxu0 %v817
      %v828 = vpop.f32.mrf.mxu0
      %v829 = vadd.f32 %v802, %v828
      %v830 = vpop.f32.mrf.mxu0
      %831 = vdwg.mxu0
      %v832 = vmul.f32 %v829, 0.70710677
      %v833 = vand.u32 2147483647, %v832
      %v834 = vmul.f32 %v833, 0.3275911
      %v835 = vadd.f32 %v834, 1.0
      %v836 = vrcp.pop %v835
      %v837 = vmul.f32 %v835, %v836
      %v838 = vsub.f32 1.0, %v837
      %v839 = vmul.f32 %v836, %v838
      %v840 = vadd.f32 %v836, %v839
      %vm841 = vweird.f32 %v835
      %vm842 = vweird.f32 %v836
      %vm843 = vmor %vm841, %vm842
      %v844 = vsel %vm843, %v836, %v840
      %v845 = vand.u32 2147483647, %v835
      %vm846 = vcmp.eq.f32.partialorder %v845, 8.507059e+37
      %v847 = vand.u32 %v835, 2147483648
      %v848 = vor.u32 1.1754944e-38, %v847
      %v849 = vsel %vm846, %v848, %v844
      %v850 = vmul.f32 1.0, %v849
      %v851 = vmul.f32 %v850, 1.0614054
      %v852 = vadd.f32 %v851, -1.4531521
      %v853 = vmul.f32 %v850, %v852
      %v854 = vadd.f32 %v853, 1.4214138
      %v855 = vmul.f32 %v850, %v854
      %v856 = vadd.f32 %v855, -0.28449672
      %v857 = vmul.f32 %v850, %v856
      %v858 = vadd.f32 %v857, 0.2548296
      %v859 = vmul.f32 %v850, %v858
      %v860 = vsub.f32 0.0, %v833
      %v861 = vmul.f32 %v860, %v833
      %v862 = vmul.f32 %v861, 1.442695
      %v863 = vpow.pop %v862
      %v864 = vmul.f32 %v859, %v863
      %v865 = vsub.f32 1.0, %v864
      %vm866 = vcmp.lt.f32.partialorder %v832, 0.0
      %v867 = vsub.f32 0.0, %v865
      %v868 = vsel %vm866, %v867, %v865
      %v869 = vmul.f32 %v829, 0.5
      %v870 = vadd.f32 %v868, 1.0
      %v871 = vmul.f32 %v869, %v870
      %v872 = vpack.c.bf16 %v871, %v871
      %v873 = vperm.slane %v783, 1
      %v882 = vunpack.c.l.b16 %v788
      %v883 = vunpack.c.l.b16 %v789
      %v884 = vunpack.c.l.b16 %v790
      %v885 = vunpack.c.l.b16 %v791
      %v886 = vunpack.c.l.b16 %v792
      %v887 = vunpack.c.l.b16 %v793
      %v888 = vunpack.c.l.b16 %v794
      %v889 = vunpack.c.l.b16 %v795
      %v890 = vpack.c.b16 %v883, %v882
      %v891 = vpack.c.b16 %v885, %v884
      %v892 = vpack.c.b16 %v887, %v886
      %v893 = vpack.c.b16 %v889, %v888
      %vm898 = vcmask 523264
      %v900 = vsel %vm898, %v872, 0
      %902 = vmatpush.bf16.msra.mxu0 0
      %903 = vmatpush.bf16.msra.mxu0 0
      %904 = vmatpush.bf16.msra.mxu0 0
      %905 = vmatpush.bf16.msra.mxu0 0
      %906 = vmatpush.bf16.msra.mxu0 %v893
      %907 = vmatpush.bf16.msra.mxu0 %v892
      %908 = vmatpush.bf16.msra.mxu0 %v891
      %909 = vmatpush.bf16.msra.mxu0 %v890
      %910 = vmatmul.bf16.gmra.mxu0 %v900
      %v911 = vpop.f32.mrf.mxu0
      %v912 = vadd.f32 %v873, %v911
      %v913 = vpop.f32.mrf.mxu0
      %914 = vdwg.mxu0
      %v915 = vadd.f32 %v800, %v912
      %v916 = vperm.slane %v783, 4
      %v917 = vmul.f32 %v915, %v916
      %v918 = vperm.slane %v783, 5
      %v919 = vadd.f32 %v917, %v918
      %vm920 = vcmask 254976
      %921 = vst.msk [vmem:[#allocation2] sm:$0x3] %vm920, %v919
      %923 = vrot.lane.b32.xlu0 %v797, 32
      %v924 = vpop.permute.xlu0 %923
      %v926 = vmul.f32 %v796, %v924
      %928 = vrot.lane.b32.xlu0 %v799, 32
      %v929 = vpop.permute.xlu0 %928
      %v931 = vadd.f32 %v926, %v929
      %v932 = vpack.c.bf16 %v931, %v931
      %934 = vrot.lane.b32.xlu0 %v932, 96
      %v935 = vpop.permute.xlu0 %934
      %v937 = vsel %vm815, %v935, 0
      %939 = vmatpush.bf16.msra.mxu0 0
      %940 = vmatpush.bf16.msra.mxu0 0
      %941 = vmatpush.bf16.msra.mxu0 0
      %942 = vmatpush.bf16.msra.mxu0 0
      %943 = vmatpush.bf16.msra.mxu0 0
      %944 = vmatpush.bf16.msra.mxu0 0
      %945 = vmatpush.bf16.msra.mxu0 %v812
      %946 = vmatpush.bf16.msra.mxu0 %v811
      %947 = vmatmul.bf16.gmra.mxu0 %v937
      %v948 = vpop.f32.mrf.mxu0
      %v949 = vadd.f32 %v802, %v948
      %v950 = vpop.f32.mrf.mxu0
      %951 = vdwg.mxu0
      %v952 = vmul.f32 %v949, 0.70710677
      %v953 = vand.u32 2147483647, %v952
      %v954 = vmul.f32 %v953, 0.3275911
      %v955 = vadd.f32 %v954, 1.0
      %v956 = vrcp.pop %v955
      %v957 = vmul.f32 %v955, %v956
      %v958 = vsub.f32 1.0, %v957
      %v959 = vmul.f32 %v956, %v958
      %v960 = vadd.f32 %v956, %v959
      %vm961 = vweird.f32 %v955
      %vm962 = vweird.f32 %v956
      %vm963 = vmor %vm961, %vm962
      %v964 = vsel %vm963, %v956, %v960
      %v965 = vand.u32 2147483647, %v955
      %vm966 = vcmp.eq.f32.partialorder %v965, 8.507059e+37
      %v967 = vand.u32 %v955, 2147483648
      %v968 = vor.u32 1.1754944e-38, %v967
      %v969 = vsel %vm966, %v968, %v964
      %v970 = vmul.f32 1.0, %v969
      %v971 = vmul.f32 %v970, 1.0614054
      %v972 = vadd.f32 %v971, -1.4531521
      %v973 = vmul.f32 %v970, %v972
      %v974 = vadd.f32 %v973, 1.4214138
      %v975 = vmul.f32 %v970, %v974
      %v976 = vadd.f32 %v975, -0.28449672
      %v977 = vmul.f32 %v970, %v976
      %v978 = vadd.f32 %v977, 0.2548296
      %v979 = vmul.f32 %v970, %v978
      %v980 = vsub.f32 0.0, %v953
      %v981 = vmul.f32 %v980, %v953
      %v982 = vmul.f32 %v981, 1.442695
      %v983 = vpow.pop %v982
      %v984 = vmul.f32 %v979, %v983
      %v985 = vsub.f32 1.0, %v984
      %vm986 = vcmp.lt.f32.partialorder %v952, 0.0
      %v987 = vsub.f32 0.0, %v985
      %v988 = vsel %vm986, %v987, %v985
      %v989 = vmul.f32 %v949, 0.5
      %v990 = vadd.f32 %v988, 1.0
      %v991 = vmul.f32 %v989, %v990
      %v992 = vpack.c.bf16 %v991, %v991
      %v994 = vsel %vm898, %v992, 0
      %996 = vmatpush.bf16.msra.mxu0 0
      %997 = vmatpush.bf16.msra.mxu0 0
      %998 = vmatpush.bf16.msra.mxu0 0
      %999 = vmatpush.bf16.msra.mxu0 0
      %1000 = vmatpush.bf16.msra.mxu0 %v893
      %1001 = vmatpush.bf16.msra.mxu0 %v892
      %1002 = vmatpush.bf16.msra.mxu0 %v891
      %1003 = vmatpush.bf16.msra.mxu0 %v890
      %1004 = vmatmul.bf16.gmra.mxu0 %v994
      %v1005 = vpop.f32.mrf.mxu0
      %v1006 = vadd.f32 %v873, %v1005
      %v1007 = vpop.f32.mrf.mxu0
      %1008 = vdwg.mxu0
      %1010 = vrot.lane.b32.xlu0 %v1006, 32
      %v1011 = vpop.permute.xlu0 %1010
      %v1013 = vadd.f32 %v931, %v1011
      %1015 = vrot.lane.b32.xlu0 %v916, 32
      %v1016 = vpop.permute.xlu0 %1015
      %v1018 = vmul.f32 %v1013, %v1016
      %1020 = vrot.lane.b32.xlu0 %v918, 32
      %v1021 = vpop.permute.xlu0 %1020
      %v1023 = vadd.f32 %v1018, %v1021
      %vm1024 = vcmask 517376
      %1025 = vst.msk [vmem:[#allocation2] sm:$0x3] %vm1024, %v1023
      %1026 = vrot.lane.b32.xlu0 %v797, 64
      %v1027 = vpop.permute.xlu0 %1026
      %v1029 = vmul.f32 %v796, %v1027
      %1030 = vrot.lane.b32.xlu0 %v799, 64
      %v1031 = vpop.permute.xlu0 %1030
      %v1033 = vadd.f32 %v1029, %v1031
      %v1034 = vpack.c.bf16 %v1033, %v1033
      %1036 = vrot.lane.b32.xlu0 %v1034, 64
      %v1037 = vpop.permute.xlu0 %1036
      %v1039 = vsel %vm815, %v1037, 0
      %1041 = vmatpush.bf16.msra.mxu0 0
      %1042 = vmatpush.bf16.msra.mxu0 0
      %1043 = vmatpush.bf16.msra.mxu0 0
      %1044 = vmatpush.bf16.msra.mxu0 0
      %1045 = vmatpush.bf16.msra.mxu0 0
      %1046 = vmatpush.bf16.msra.mxu0 0
      %1047 = vmatpush.bf16.msra.mxu0 %v812
      %1048 = vmatpush.bf16.msra.mxu0 %v811
      %1049 = vmatmul.bf16.gmra.mxu0 %v1039
      %v1050 = vpop.f32.mrf.mxu0
      %v1051 = vadd.f32 %v802, %v1050
      %v1052 = vpop.f32.mrf.mxu0
      %1053 = vdwg.mxu0
      %v1054 = vmul.f32 %v1051, 0.70710677
      %v1055 = vand.u32 2147483647, %v1054
      %v1056 = vmul.f32 %v1055, 0.3275911
      %v1057 = vadd.f32 %v1056, 1.0
      %v1058 = vrcp.pop %v1057
      %v1059 = vmul.f32 %v1057, %v1058
      %v1060 = vsub.f32 1.0, %v1059
      %v1061 = vmul.f32 %v1058, %v1060
      %v1062 = vadd.f32 %v1058, %v1061
      %vm1063 = vweird.f32 %v1057
      %vm1064 = vweird.f32 %v1058
      %vm1065 = vmor %vm1063, %vm1064
      %v1066 = vsel %vm1065, %v1058, %v1062
      %v1067 = vand.u32 2147483647, %v1057
      %vm1068 = vcmp.eq.f32.partialorder %v1067, 8.507059e+37
      %v1069 = vand.u32 %v1057, 2147483648
      %v1070 = vor.u32 1.1754944e-38, %v1069
      %v1071 = vsel %vm1068, %v1070, %v1066
      %v1072 = vmul.f32 1.0, %v1071
      %v1073 = vmul.f32 %v1072, 1.0614054
      %v1074 = vadd.f32 %v1073, -1.4531521
      %v1075 = vmul.f32 %v1072, %v1074
      %v1076 = vadd.f32 %v1075, 1.4214138
      %v1077 = vmul.f32 %v1072, %v1076
      %v1078 = vadd.f32 %v1077, -0.28449672
      %v1079 = vmul.f32 %v1072, %v1078
      %v1080 = vadd.f32 %v1079, 0.2548296
      %v1081 = vmul.f32 %v1072, %v1080
      %v1082 = vsub.f32 0.0, %v1055
      %v1083 = vmul.f32 %v1082, %v1055
      %v1084 = vmul.f32 %v1083, 1.442695
      %v1085 = vpow.pop %v1084
      %v1086 = vmul.f32 %v1081, %v1085
      %v1087 = vsub.f32 1.0, %v1086
      %vm1088 = vcmp.lt.f32.partialorder %v1054, 0.0
      %v1089 = vsub.f32 0.0, %v1087
      %v1090 = vsel %vm1088, %v1089, %v1087
      %v1091 = vmul.f32 %v1051, 0.5
      %v1092 = vadd.f32 %v1090, 1.0
      %v1093 = vmul.f32 %v1091, %v1092
      %v1094 = vpack.c.bf16 %v1093, %v1093
      %v1096 = vsel %vm898, %v1094, 0
      %1098 = vmatpush.bf16.msra.mxu0 0
      %1099 = vmatpush.bf16.msra.mxu0 0
      %1100 = vmatpush.bf16.msra.mxu0 0
      %1101 = vmatpush.bf16.msra.mxu0 0
      %1102 = vmatpush.bf16.msra.mxu0 %v893
      %1103 = vmatpush.bf16.msra.mxu0 %v892
      %1104 = vmatpush.bf16.msra.mxu0 %v891
      %1105 = vmatpush.bf16.msra.mxu0 %v890
      %1106 = vmatmul.bf16.gmra.mxu0 %v1096
      %v1107 = vpop.f32.mrf.mxu0
      %v1108 = vadd.f32 %v873, %v1107
      %v1109 = vpop.f32.mrf.mxu0
      %1110 = vdwg.mxu0
      %1112 = vrot.lane.b32.xlu0 %v1108, 64
      %v1113 = vpop.permute.xlu0 %1112
      %v1115 = vadd.f32 %v1033, %v1113
      %1116 = vrot.lane.b32.xlu0 %v916, 64
      %v1117 = vpop.permute.xlu0 %1116
      %v1119 = vmul.f32 %v1115, %v1117
      %1120 = vrot.lane.b32.xlu0 %v918, 64
      %v1121 = vpop.permute.xlu0 %1120
      %v1123 = vadd.f32 %v1119, %v1121
      %vm1124 = vcmask 779776
      %1125 = vst.msk [vmem:[#allocation2] sm:$0x3] %vm1124, %v1123
      %1126 = vrot.lane.b32.xlu0 %v797, 96
      %v1127 = vpop.permute.xlu0 %1126
      %v1129 = vmul.f32 %v796, %v1127
      %1130 = vrot.lane.b32.xlu0 %v799, 96
      %v1131 = vpop.permute.xlu0 %1130
      %v1133 = vadd.f32 %v1129, %v1131
      %v1134 = vpack.c.bf16 %v1133, %v1133
      %1136 = vrot.lane.b32.xlu0 %v1134, 32
      %v1137 = vpop.permute.xlu0 %1136
      %v1139 = vsel %vm815, %v1137, 0
      %1141 = vmatpush.bf16.msra.mxu0 0
      %1142 = vmatpush.bf16.msra.mxu0 0
      %1143 = vmatpush.bf16.msra.mxu0 0
      %1144 = vmatpush.bf16.msra.mxu0 0
      %1145 = vmatpush.bf16.msra.mxu0 0
      %1146 = vmatpush.bf16.msra.mxu0 0
      %1147 = vmatpush.bf16.msra.mxu0 %v812
      %1148 = vmatpush.bf16.msra.mxu0 %v811
      %1149 = vmatmul.bf16.gmra.mxu0 %v1139
      %v1150 = vpop.f32.mrf.mxu0
      %v1151 = vadd.f32 %v802, %v1150
      %v1152 = vpop.f32.mrf.mxu0
      %1153 = vdwg.mxu0
      %v1154 = vmul.f32 %v1151, 0.70710677
      %v1155 = vand.u32 2147483647, %v1154
      %v1156 = vmul.f32 %v1155, 0.3275911
      %v1157 = vadd.f32 %v1156, 1.0
      %v1158 = vrcp.pop %v1157
      %v1159 = vmul.f32 %v1157, %v1158
      %v1160 = vsub.f32 1.0, %v1159
      %v1161 = vmul.f32 %v1158, %v1160
      %v1162 = vadd.f32 %v1158, %v1161
      %vm1163 = vweird.f32 %v1157
      %vm1164 = vweird.f32 %v1158
      %vm1165 = vmor %vm1163, %vm1164
      %v1166 = vsel %vm1165, %v1158, %v1162
      %v1167 = vand.u32 2147483647, %v1157
      %vm1168 = vcmp.eq.f32.partialorder %v1167, 8.507059e+37
      %v1169 = vand.u32 %v1157, 2147483648
      %v1170 = vor.u32 1.1754944e-38, %v1169
      %v1171 = vsel %vm1168, %v1170, %v1166
      %v1172 = vmul.f32 1.0, %v1171
      %v1173 = vmul.f32 %v1172, 1.0614054
      %v1174 = vadd.f32 %v1173, -1.4531521
      %v1175 = vmul.f32 %v1172, %v1174
      %v1176 = vadd.f32 %v1175, 1.4214138
      %v1177 = vmul.f32 %v1172, %v1176
      %v1178 = vadd.f32 %v1177, -0.28449672
      %v1179 = vmul.f32 %v1172, %v1178
      %v1180 = vadd.f32 %v1179, 0.2548296
      %v1181 = vmul.f32 %v1172, %v1180
      %v1182 = vsub.f32 0.0, %v1155
      %v1183 = vmul.f32 %v1182, %v1155
      %v1184 = vmul.f32 %v1183, 1.442695
      %v1185 = vpow.pop %v1184
      %v1186 = vmul.f32 %v1181, %v1185
      %v1187 = vsub.f32 1.0, %v1186
      %vm1188 = vcmp.lt.f32.partialorder %v1154, 0.0
      %v1189 = vsub.f32 0.0, %v1187
      %v1190 = vsel %vm1188, %v1189, %v1187
      %v1191 = vmul.f32 %v1151, 0.5
      %v1192 = vadd.f32 %v1190, 1.0
      %v1193 = vmul.f32 %v1191, %v1192
      %v1194 = vpack.c.bf16 %v1193, %v1193
      %v1196 = vsel %vm898, %v1194, 0
      %1198 = vmatpush.bf16.msra.mxu0 0
      %1199 = vmatpush.bf16.msra.mxu0 0
      %1200 = vmatpush.bf16.msra.mxu0 0
      %1201 = vmatpush.bf16.msra.mxu0 0
      %1202 = vmatpush.bf16.msra.mxu0 %v893
      %1203 = vmatpush.bf16.msra.mxu0 %v892
      %1204 = vmatpush.bf16.msra.mxu0 %v891
      %1205 = vmatpush.bf16.msra.mxu0 %v890
      %1206 = vmatmul.bf16.gmra.mxu0 %v1196
      %v1207 = vpop.f32.mrf.mxu0
      %v1208 = vadd.f32 %v873, %v1207
      %v1209 = vpop.f32.mrf.mxu0
      %1210 = vdwg.mxu0
      %1212 = vrot.lane.b32.xlu0 %v1208, 96
      %v1213 = vpop.permute.xlu0 %1212
      %v1215 = vadd.f32 %v1133, %v1213
      %1216 = vrot.lane.b32.xlu0 %v916, 96
      %v1217 = vpop.permute.xlu0 %1216
      %v1219 = vmul.f32 %v1215, %v1217
      %1220 = vrot.lane.b32.xlu0 %v918, 96
      %v1221 = vpop.permute.xlu0 %1220
      %v1223 = vadd.f32 %v1219, %v1221
      %vm1224 = vcmask 1042176
      %1225 = vst.msk [vmem:[#allocation2] sm:$0x3] %vm1224, %v1223
      %v1226 = vadd.f32 %v591, %v780
      %v1227 = vmul.f32 %v1226, %v797
      %v1228 = vadd.f32 %v1227, %v799
      %v1229 = vpack.c.bf16 %v1228, %v1228
      %v1231 = vsel %vm815, %v1229, 0
      %1233 = vmatpush.bf16.msra.mxu0 0
      %1234 = vmatpush.bf16.msra.mxu0 0
      %1235 = vmatpush.bf16.msra.mxu0 0
      %1236 = vmatpush.bf16.msra.mxu0 0
      %1237 = vmatpush.bf16.msra.mxu0 0
      %1238 = vmatpush.bf16.msra.mxu0 0
      %1239 = vmatpush.bf16.msra.mxu0 %v812
      %1240 = vmatpush.bf16.msra.mxu0 %v811
      %1241 = vmatmul.bf16.gmra.mxu0 %v1231
      %v1242 = vpop.f32.mrf.mxu0
      %v1243 = vadd.f32 %v802, %v1242
      %v1244 = vpop.f32.mrf.mxu0
      %1245 = vdwg.mxu0
      %v1246 = vmul.f32 %v1243, 0.70710677
      %v1247 = vand.u32 2147483647, %v1246
      %v1248 = vmul.f32 %v1247, 0.3275911
      %v1249 = vadd.f32 %v1248, 1.0
      %v1250 = vrcp.pop %v1249
      %v1251 = vmul.f32 %v1249, %v1250
      %v1252 = vsub.f32 1.0, %v1251
      %v1253 = vmul.f32 %v1250, %v1252
      %v1254 = vadd.f32 %v1250, %v1253
      %vm1255 = vweird.f32 %v1249
      %vm1256 = vweird.f32 %v1250
      %vm1257 = vmor %vm1255, %vm1256
      %v1258 = vsel %vm1257, %v1250, %v1254
      %v1259 = vand.u32 2147483647, %v1249
      %vm1260 = vcmp.eq.f32.partialorder %v1259, 8.507059e+37
      %v1261 = vand.u32 %v1249, 2147483648
      %v1262 = vor.u32 1.1754944e-38, %v1261
      %v1263 = vsel %vm1260, %v1262, %v1258
      %v1264 = vmul.f32 1.0, %v1263
      %v1265 = vmul.f32 %v1264, 1.0614054
      %v1266 = vadd.f32 %v1265, -1.4531521
      %v1267 = vmul.f32 %v1264, %v1266
      %v1268 = vadd.f32 %v1267, 1.4214138
      %v1269 = vmul.f32 %v1264, %v1268
      %v1270 = vadd.f32 %v1269, -0.28449672
      %v1271 = vmul.f32 %v1264, %v1270
      %v1272 = vadd.f32 %v1271, 0.2548296
      %v1273 = vmul.f32 %v1264, %v1272
      %v1274 = vsub.f32 0.0, %v1247
      %v1275 = vmul.f32 %v1274, %v1247
      %v1276 = vmul.f32 %v1275, 1.442695
      %v1277 = vpow.pop %v1276
      %v1278 = vmul.f32 %v1273, %v1277
      %v1279 = vsub.f32 1.0, %v1278
      %vm1280 = vcmp.lt.f32.partialorder %v1246, 0.0
      %v1281 = vsub.f32 0.0, %v1279
      %v1282 = vsel %vm1280, %v1281, %v1279
      %v1283 = vmul.f32 %v1243, 0.5
      %v1284 = vadd.f32 %v1282, 1.0
      %v1285 = vmul.f32 %v1283, %v1284
      %v1286 = vpack.c.bf16 %v1285, %v1285
      %v1288 = vsel %vm898, %v1286, 0
      %1290 = vmatpush.bf16.msra.mxu0 0
      %1291 = vmatpush.bf16.msra.mxu0 0
      %1292 = vmatpush.bf16.msra.mxu0 0
      %1293 = vmatpush.bf16.msra.mxu0 0
      %1294 = vmatpush.bf16.msra.mxu0 %v893
      %1295 = vmatpush.bf16.msra.mxu0 %v892
      %1296 = vmatpush.bf16.msra.mxu0 %v891
      %1297 = vmatpush.bf16.msra.mxu0 %v890
      %1298 = vmatmul.bf16.gmra.mxu0 %v1288
      %v1299 = vpop.f32.mrf.mxu0
      %v1300 = vadd.f32 %v873, %v1299
      %v1301 = vpop.f32.mrf.mxu0
      %1302 = vdwg.mxu0
      %v1303 = vadd.f32 %v1228, %v1300
      %v1304 = vmul.f32 %v1303, %v916
      %v1305 = vadd.f32 %v1304, %v918
      %1306 = vst.msk [vmem:[%s590] sm:$0x3] %vm920, %v1305
      %v1307 = vmul.f32 %v1226, %v924
      %v1308 = vadd.f32 %v1307, %v929
      %v1309 = vpack.c.bf16 %v1308, %v1308
      %1311 = vrot.lane.b32.xlu0 %v1309, 96
      %v1312 = vpop.permute.xlu0 %1311
      %v1314 = vsel %vm815, %v1312, 0
      %1316 = vmatpush.bf16.msra.mxu0 0
      %1317 = vmatpush.bf16.msra.mxu0 0
      %1318 = vmatpush.bf16.msra.mxu0 0
      %1319 = vmatpush.bf16.msra.mxu0 0
      %1320 = vmatpush.bf16.msra.mxu0 0
      %1321 = vmatpush.bf16.msra.mxu0 0
      %1322 = vmatpush.bf16.msra.mxu0 %v812
      %1323 = vmatpush.bf16.msra.mxu0 %v811
      %1324 = vmatmul.bf16.gmra.mxu0 %v1314
      %v1325 = vpop.f32.mrf.mxu0
      %v1326 = vadd.f32 %v802, %v1325
      %v1327 = vpop.f32.mrf.mxu0
      %1328 = vdwg.mxu0
      %v1329 = vmul.f32 %v1326, 0.70710677
      %v1330 = vand.u32 2147483647, %v1329
      %v1331 = vmul.f32 %v1330, 0.3275911
      %v1332 = vadd.f32 %v1331, 1.0
      %v1333 = vrcp.pop %v1332
      %v1334 = vmul.f32 %v1332, %v1333
      %v1335 = vsub.f32 1.0, %v1334
      %v1336 = vmul.f32 %v1333, %v1335
      %v1337 = vadd.f32 %v1333, %v1336
      %vm1338 = vweird.f32 %v1332
      %vm1339 = vweird.f32 %v1333
      %vm1340 = vmor %vm1338, %vm1339
      %v1341 = vsel %vm1340, %v1333, %v1337
      %v1342 = vand.u32 2147483647, %v1332
      %vm1343 = vcmp.eq.f32.partialorder %v1342, 8.507059e+37
      %v1344 = vand.u32 %v1332, 2147483648
      %v1345 = vor.u32 1.1754944e-38, %v1344
      %v1346 = vsel %vm1343, %v1345, %v1341
      %v1347 = vmul.f32 1.0, %v1346
      %v1348 = vmul.f32 %v1347, 1.0614054
      %v1349 = vadd.f32 %v1348, -1.4531521
      %v1350 = vmul.f32 %v1347, %v1349
      %v1351 = vadd.f32 %v1350, 1.4214138
      %v1352 = vmul.f32 %v1347, %v1351
      %v1353 = vadd.f32 %v1352, -0.28449672
      %v1354 = vmul.f32 %v1347, %v1353
      %v1355 = vadd.f32 %v1354, 0.2548296
      %v1356 = vmul.f32 %v1347, %v1355
      %v1357 = vsub.f32 0.0, %v1330
      %v1358 = vmul.f32 %v1357, %v1330
      %v1359 = vmul.f32 %v1358, 1.442695
      %v1360 = vpow.pop %v1359
      %v1361 = vmul.f32 %v1356, %v1360
      %v1362 = vsub.f32 1.0, %v1361
      %vm1363 = vcmp.lt.f32.partialorder %v1329, 0.0
      %v1364 = vsub.f32 0.0, %v1362
      %v1365 = vsel %vm1363, %v1364, %v1362
      %v1366 = vmul.f32 %v1326, 0.5
      %v1367 = vadd.f32 %v1365, 1.0
      %v1368 = vmul.f32 %v1366, %v1367
      %v1369 = vpack.c.bf16 %v1368, %v1368
      %v1371 = vsel %vm898, %v1369, 0
      %1373 = vmatpush.bf16.msra.mxu0 0
      %1374 = vmatpush.bf16.msra.mxu0 0
      %1375 = vmatpush.bf16.msra.mxu0 0
      %1376 = vmatpush.bf16.msra.mxu0 0
      %1377 = vmatpush.bf16.msra.mxu0 %v893
      %1378 = vmatpush.bf16.msra.mxu0 %v892
      %1379 = vmatpush.bf16.msra.mxu0 %v891
      %1380 = vmatpush.bf16.msra.mxu0 %v890
      %1381 = vmatmul.bf16.gmra.mxu0 %v1371
      %v1382 = vpop.f32.mrf.mxu0
      %v1383 = vadd.f32 %v873, %v1382
      %v1384 = vpop.f32.mrf.mxu0
      %1385 = vdwg.mxu0
      %1387 = vrot.lane.b32.xlu0 %v1383, 32
      %v1388 = vpop.permute.xlu0 %1387
      %v1390 = vadd.f32 %v1308, %v1388
      %v1391 = vmul.f32 %v1390, %v1016
      %v1392 = vadd.f32 %v1391, %v1021
      %1393 = vst.msk [vmem:[%s590] sm:$0x3] %vm1024, %v1392
      %v1394 = vmul.f32 %v1226, %v1027
      %v1395 = vadd.f32 %v1394, %v1031
      %v1396 = vpack.c.bf16 %v1395, %v1395
      %1398 = vrot.lane.b32.xlu0 %v1396, 64
      %v1399 = vpop.permute.xlu0 %1398
      %v1401 = vsel %vm815, %v1399, 0
      %1403 = vmatpush.bf16.msra.mxu0 0
      %1404 = vmatpush.bf16.msra.mxu0 0
      %1405 = vmatpush.bf16.msra.mxu0 0
      %1406 = vmatpush.bf16.msra.mxu0 0
      %1407 = vmatpush.bf16.msra.mxu0 0
      %1408 = vmatpush.bf16.msra.mxu0 0
      %1409 = vmatpush.bf16.msra.mxu0 %v812
      %1410 = vmatpush.bf16.msra.mxu0 %v811
      %1411 = vmatmul.bf16.gmra.mxu0 %v1401
      %v1412 = vpop.f32.mrf.mxu0
      %v1413 = vadd.f32 %v802, %v1412
      %v1414 = vpop.f32.mrf.mxu0
      %1415 = vdwg.mxu0
      %v1416 = vmul.f32 %v1413, 0.70710677
      %v1417 = vand.u32 2147483647, %v1416
      %v1418 = vmul.f32 %v1417, 0.3275911
      %v1419 = vadd.f32 %v1418, 1.0
      %v1420 = vrcp.pop %v1419
      %v1421 = vmul.f32 %v1419, %v1420
      %v1422 = vsub.f32 1.0, %v1421
      %v1423 = vmul.f32 %v1420, %v1422
      %v1424 = vadd.f32 %v1420, %v1423
      %vm1425 = vweird.f32 %v1419
      %vm1426 = vweird.f32 %v1420
      %vm1427 = vmor %vm1425, %vm1426
      %v1428 = vsel %vm1427, %v1420, %v1424
      %v1429 = vand.u32 2147483647, %v1419
      %vm1430 = vcmp.eq.f32.partialorder %v1429, 8.507059e+37
      %v1431 = vand.u32 %v1419, 2147483648
      %v1432 = vor.u32 1.1754944e-38, %v1431
      %v1433 = vsel %vm1430, %v1432, %v1428
      %v1434 = vmul.f32 1.0, %v1433
      %v1435 = vmul.f32 %v1434, 1.0614054
      %v1436 = vadd.f32 %v1435, -1.4531521
      %v1437 = vmul.f32 %v1434, %v1436
      %v1438 = vadd.f32 %v1437, 1.4214138
      %v1439 = vmul.f32 %v1434, %v1438
      %v1440 = vadd.f32 %v1439, -0.28449672
      %v1441 = vmul.f32 %v1434, %v1440
      %v1442 = vadd.f32 %v1441, 0.2548296
      %v1443 = vmul.f32 %v1434, %v1442
      %v1444 = vsub.f32 0.0, %v1417
      %v1445 = vmul.f32 %v1444, %v1417
      %v1446 = vmul.f32 %v1445, 1.442695
      %v1447 = vpow.pop %v1446
      %v1448 = vmul.f32 %v1443, %v1447
      %v1449 = vsub.f32 1.0, %v1448
      %vm1450 = vcmp.lt.f32.partialorder %v1416, 0.0
      %v1451 = vsub.f32 0.0, %v1449
      %v1452 = vsel %vm1450, %v1451, %v1449
      %v1453 = vmul.f32 %v1413, 0.5
      %v1454 = vadd.f32 %v1452, 1.0
      %v1455 = vmul.f32 %v1453, %v1454
      %v1456 = vpack.c.bf16 %v1455, %v1455
      %v1458 = vsel %vm898, %v1456, 0
      %1460 = vmatpush.bf16.msra.mxu0 0
      %1461 = vmatpush.bf16.msra.mxu0 0
      %1462 = vmatpush.bf16.msra.mxu0 0
      %1463 = vmatpush.bf16.msra.mxu0 0
      %1464 = vmatpush.bf16.msra.mxu0 %v893
      %1465 = vmatpush.bf16.msra.mxu0 %v892
      %1466 = vmatpush.bf16.msra.mxu0 %v891
      %1467 = vmatpush.bf16.msra.mxu0 %v890
      %1468 = vmatmul.bf16.gmra.mxu0 %v1458
      %v1469 = vpop.f32.mrf.mxu0
      %v1470 = vadd.f32 %v873, %v1469
      %v1471 = vpop.f32.mrf.mxu0
      %1472 = vdwg.mxu0
      %1474 = vrot.lane.b32.xlu0 %v1470, 64
      %v1475 = vpop.permute.xlu0 %1474
      %v1477 = vadd.f32 %v1395, %v1475
      %v1478 = vmul.f32 %v1477, %v1117
      %v1479 = vadd.f32 %v1478, %v1121
      %1480 = vst.msk [vmem:[%s590] sm:$0x3] %vm1124, %v1479
      %v1481 = vmul.f32 %v1226, %v1127
      %v1482 = vadd.f32 %v1481, %v1131
      %v1483 = vpack.c.bf16 %v1482, %v1482
      %1485 = vrot.lane.b32.xlu0 %v1483, 32
      %v1486 = vpop.permute.xlu0 %1485
      %v1488 = vsel %vm815, %v1486, 0
      %1490 = vmatpush.bf16.msra.mxu0 0
      %1491 = vmatpush.bf16.msra.mxu0 0
      %1492 = vmatpush.bf16.msra.mxu0 0
      %1493 = vmatpush.bf16.msra.mxu0 0
      %1494 = vmatpush.bf16.msra.mxu0 0
      %1495 = vmatpush.bf16.msra.mxu0 0
      %1496 = vmatpush.bf16.msra.mxu0 %v812
      %1497 = vmatpush.bf16.msra.mxu0 %v811
      %1498 = vmatmul.bf16.gmra.mxu0 %v1488
      %v1499 = vpop.f32.mrf.mxu0
      %v1500 = vadd.f32 %v802, %v1499
      %v1501 = vpop.f32.mrf.mxu0
      %1502 = vdwg.mxu0
      %v1503 = vmul.f32 %v1500, 0.70710677
      %v1504 = vand.u32 2147483647, %v1503
      %v1505 = vmul.f32 %v1504, 0.3275911
      %v1506 = vadd.f32 %v1505, 1.0
      %v1507 = vrcp.pop %v1506
      %v1508 = vmul.f32 %v1506, %v1507
      %v1509 = vsub.f32 1.0, %v1508
      %v1510 = vmul.f32 %v1507, %v1509
      %v1511 = vadd.f32 %v1507, %v1510
      %vm1512 = vweird.f32 %v1506
      %vm1513 = vweird.f32 %v1507
      %vm1514 = vmor %vm1512, %vm1513
      %v1515 = vsel %vm1514, %v1507, %v1511
      %v1516 = vand.u32 2147483647, %v1506
      %vm1517 = vcmp.eq.f32.partialorder %v1516, 8.507059e+37
      %v1518 = vand.u32 %v1506, 2147483648
      %v1519 = vor.u32 1.1754944e-38, %v1518
      %v1520 = vsel %vm1517, %v1519, %v1515
      %v1521 = vmul.f32 1.0, %v1520
      %v1522 = vmul.f32 %v1521, 1.0614054
      %v1523 = vadd.f32 %v1522, -1.4531521
      %v1524 = vmul.f32 %v1521, %v1523
      %v1525 = vadd.f32 %v1524, 1.4214138
      %v1526 = vmul.f32 %v1521, %v1525
      %v1527 = vadd.f32 %v1526, -0.28449672
      %v1528 = vmul.f32 %v1521, %v1527
      %v1529 = vadd.f32 %v1528, 0.2548296
      %v1530 = vmul.f32 %v1521, %v1529
      %v1531 = vsub.f32 0.0, %v1504
      %v1532 = vmul.f32 %v1531, %v1504
      %v1533 = vmul.f32 %v1532, 1.442695
      %v1534 = vpow.pop %v1533
      %v1535 = vmul.f32 %v1530, %v1534
      %v1536 = vsub.f32 1.0, %v1535
      %vm1537 = vcmp.lt.f32.partialorder %v1503, 0.0
      %v1538 = vsub.f32 0.0, %v1536
      %v1539 = vsel %vm1537, %v1538, %v1536
      %v1540 = vmul.f32 %v1500, 0.5
      %v1541 = vadd.f32 %v1539, 1.0
      %v1542 = vmul.f32 %v1540, %v1541
      %v1543 = vpack.c.bf16 %v1542, %v1542
      %v1545 = vsel %vm898, %v1543, 0
      %1547 = vmatpush.bf16.msra.mxu0 0
      %1548 = vmatpush.bf16.msra.mxu0 0
      %1549 = vmatpush.bf16.msra.mxu0 0
      %1550 = vmatpush.bf16.msra.mxu0 0
      %1551 = vmatpush.bf16.msra.mxu0 %v893
      %1552 = vmatpush.bf16.msra.mxu0 %v892
      %1553 = vmatpush.bf16.msra.mxu0 %v891
      %1554 = vmatpush.bf16.msra.mxu0 %v890
      %1555 = vmatmul.bf16.gmra.mxu0 %v1545
      %v1556 = vpop.f32.mrf.mxu0
      %v1557 = vadd.f32 %v873, %v1556
      %v1558 = vpop.f32.mrf.mxu0
      %1559 = vdwg.mxu0
      %1561 = vrot.lane.b32.xlu0 %v1557, 96
      %v1562 = vpop.permute.xlu0 %1561
      %v1564 = vadd.f32 %v1482, %v1562
      %v1565 = vmul.f32 %v1564, %v1217
      %v1566 = vadd.f32 %v1565, %v1221
      %1567 = vst.msk [vmem:[%s590] sm:$0x3] %vm1224, %v1566
      %p1568 = scmp.eq.s32.totalorder %s24, 2
      // Predicated region
      $region57: #{tsti_encoder_forward.1} parent=51 // pred_check
        %p1569 = pneg %p1568
      $region58: #{tsti_encoder_forward.1} parent=51 // pred_check_branch
        %1571 = sbr.rel (%p1569) target = $region60
      $region59: #{tsti_encoder_forward.1} parent=51 // pred_region
        %v1572 = vld [vmem:[#allocation2] sm:$0x3]
        %1573 = vst [vmem:[%s366] sm:$0x3] %v1572
        %v1574 = vld [vmem:[%s590] sm:$0x3]
        %s1575 = scalar_lea.vmem %s366, 2
        %1576 = vst [vmem:[%s1575] sm:$0x3] %v1574
      $region60: #{tsti_encoder_forward.1} parent=51 // pred_fallthru
        _
      %p1577 = scmp.lt.s32.totalorder %s23, 0
      %s1578 = scalar_select %p1577, %s23, 0
      %s1579 = smul.addr %s1578, 2
      %s1580 = scalar_lea.vmem %s8, %s1579
      // Predicated region
      $region61: #{tsti_encoder_forward.1} parent=51 // pred_check
        %p1581 = pneg %p237
      $region62: #{tsti_encoder_forward.1} parent=51 // pred_check_branch
        %1583 = sbr.rel (%p1581) target = $region64
      $region63: #{tsti_encoder_forward.1} parent=51 // pred_region
        _
      $region64: #{tsti_encoder_forward.1} parent=51 // pred_fallthru
        _
      // Predicated region
      $region65: #{tsti_encoder_forward.1} parent=51 // pred_check
        %p1584 = pneg %p237
      $region66: #{tsti_encoder_forward.1} parent=51 // pred_check_branch
        %1586 = sbr.rel (%p1584) target = $region68
      $region67: #{tsti_encoder_forward.1} parent=51 // pred_region
        %p1587 = scmp.lt.s32.totalorder %s23, 0
        %s1588 = scalar_select %p1587, %s23, 0
        %s1589 = smul.addr %s1588, 2
        %s1590 = scalar_lea.vmem %s8, %s1589
      $region68: #{tsti_encoder_forward.1} parent=51 // pred_fallthru
        _
    $region52: #{tsti_encoder_forward.1} parent=5 // pred_fallthru
      _
    %p1591 = scmp.le.s32.totalorder 2, %s14
    // Predicated region
    $region69: #{tsti_encoder_forward.1} parent=5 // pred_check
      %p1592 = pneg %p1591
    $region70: #{tsti_encoder_forward.1} parent=5 // pred_check_branch
      %1594 = sbr.rel (%p1592) target = $region72
    $region71: #{tsti_encoder_forward.1} parent=5 // pred_region
      %s1595 = ssub.s32 %s14, 2
    $region72: #{tsti_encoder_forward.1} parent=5 // pred_fallthru
      _
  $region6: #{tsti_encoder_forward.1} parent=0 // loop_footer
    %s18 = sadd.s32 1, %s14
  $region7: #{tsti_encoder_forward.1} parent=0 // loop_footer_branch
    %13 = sbr.rel target = $region3
  $region8: #{tsti_encoder_forward.1} parent=0 // loop_exit
    _

</llo_original>
